<compile_context>
chip_gen: v7x
topology: tpu7x:2x2x1
jax: 0.10.0
libtpu: 0.0.40
codegen_flags: <defaults>
</compile_context>

<pallas_src>
import functools

import jax
import jax.numpy as jnp
from jax.experimental import pallas as pl
from jax.experimental.pallas import tpu as pltpu

BN_EPS = 1e-5    # PyTorch BatchNorm1d default eps
C_PAD = 128      # lane-dense feature width
B_PAD = 8        # pooled/batch dim padded to a full sublane


def _round_up(x, m):
    return (x + m - 1) // m * m


# --------------------------- fused Pallas kernel --------------------------- #

def _dgcnn_kernel(a_ref, h0_ref, p_ref,
                  wc_ref, bc_ref, gm_ref, bt_ref,
                  w1_ref, b1_ref, w2_ref, b2_ref, w3_ref, b3_ref,
                  o_ref,
                  x_buf, z_buf, sum_buf, sq_buf, pooled_buf,
                  *, n, n_pad, tm, n_layers):
    f32 = jnp.float32
    bf16 = jnp.bfloat16
    l = pl.program_id(0)          # conv layer index (outer, sequential)
    t = pl.program_id(1)          # row-tile index  (inner, sequential)
    n_tiles = pl.num_programs(1)

    # -- per-layer init: zero the one-pass BN statistics ---------------------
    @pl.when(t == 0)
    def _zero_stats():
        sum_buf[...] = jnp.zeros_like(sum_buf)
        sq_buf[...] = jnp.zeros_like(sq_buf)

    # -- one-time init: stage input features, pooled segment 0 ---------------
    @pl.when(jnp.logical_and(l == 0, t == 0))
    def _init():
        x_buf[...] = h0_ref[...]                          # bf16 activations
        pooled_buf[...] = jnp.zeros_like(pooled_buf)
        pooled_buf[:, 0:C_PAD] = jnp.dot(p_ref[...], h0_ref[...],
                                         preferred_element_type=f32)

    # -- per-tile GCN conv: z_tile = (A_tile @ x) @ W + b ---------------------
    # Aggregation matmul in bf16 (MXU-native on v5e/v6e/v7x), f32 accumulate.
    agg = jnp.dot(a_ref[...], x_buf[...], preferred_element_type=f32)  # [tm,128]
    z = jnp.dot(agg, wc_ref[...], preferred_element_type=f32) + bc_ref[...]
    if n_pad != n:
        # Mask padded node rows so they do not pollute the BN statistics.
        rows = t * tm + jax.lax.broadcasted_iota(jnp.int32, (tm, 1), 0)
        z = jnp.where(rows < n, z, 0.0)
    row0 = pl.multiple_of(t * tm, tm)
    z_buf[pl.ds(row0, tm), :] = z
    # One-pass BN statistics (sum / sum of squares), carried across row tiles.
    sum_buf[...] += jnp.sum(z, axis=0, keepdims=True)
    sq_buf[...] += jnp.sum(z * z, axis=0, keepdims=True)

    # -- layer finalize (after the last row tile): BN + ReLU + pooling -------
    @pl.when(t == n_tiles - 1)
    def _finalize_layer():
        inv_n = 1.0 / n
        mean = sum_buf[...] * inv_n                       # [1,128] f32
        var = sq_buf[...] * inv_n - mean * mean
        # Padded lanes: z == 0, var == 0, gamma == beta == 0 by construction
        # (packing invariant), so scale/shift are exactly 0 there.
        scale = gm_ref[...] * jax.lax.rsqrt(var + BN_EPS)
        shift = bt_ref[...] - mean * scale
        x_next = jnp.maximum(z_buf[...] * scale + shift, 0.0)   # f32 BN/ReLU
        x_bf = x_next.astype(bf16)
        x_buf[...] = x_bf                                 # next layer's input

        # Pooled segment for this layer's output (mean_nodes fold).
        seg = jnp.dot(p_ref[...], x_bf, preferred_element_type=f32)  # [8,128]
        for s in range(n_layers):                         # static unroll -> static slices
            @pl.when(l == s)
            def _(seg=seg, s=s):
                pooled_buf[:, (s + 1) * C_PAD:(s + 2) * C_PAD] = seg

        # Final layer: one K=(L+1)*128 matmul over the pooled concat slab,
        # then the rest of the MLP, all lane-dense.
        @pl.when(l == n_layers - 1)
        def _mlp():
            z1 = jnp.dot(pooled_buf[...], w1_ref[...],
                         preferred_element_type=f32) + b1_ref[...]
            h1 = jnp.maximum(z1, 0.0)
            h2 = jnp.maximum(jnp.dot(h1, w2_ref[...],
                                     preferred_element_type=f32) + b2_ref[...], 0.0)
            o_ref[...] = jnp.dot(h2, w3_ref[...],
                                 preferred_element_type=f32) + b3_ref[...]


def dgcnn_forward(packed, a_norm, pool, h, *, tm=512):
    n, in_dim = h.shape
    b = pool.shape[0]
    n_layers = packed["wc"].shape[0]

    # Row tile: multiple of 16 (bf16 sublane packing); N padded to a multiple.
    tm = max(16, min(tm, _round_up(n, 16)))
    tm = _round_up(tm, 16)
    n_pad = _round_up(n, tm)
    n_tiles = n_pad // tm

    # Zero-pad graph operands; cast aggregation/pooling operands to bf16.
    a_p = jnp.zeros((n_pad, n_pad), jnp.float32).at[:n, :n].set(a_norm).astype(jnp.bfloat16)
    p_p = jnp.zeros((B_PAD, n_pad), jnp.float32).at[:b, :n].set(pool).astype(jnp.bfloat16)
    h_p = jnp.zeros((n_pad, C_PAD), jnp.float32).at[:n, :in_dim].set(h).astype(jnp.bfloat16)

    params_bytes = sum(int(v.size) * v.dtype.itemsize for v in packed.values())
    flops = 2 * (n_layers * n_pad * n_pad * C_PAD           # aggregation A@X
                 + n_layers * n_pad * C_PAD * C_PAD          # (A@X)@W
                 + (n_layers + 1) * B_PAD * n_pad * C_PAD    # pooled segments
                 + B_PAD * ((n_layers + 1) * C_PAD + 2 * C_PAD) * C_PAD)  # MLP
    bytes_accessed = (n_layers * n_pad * n_pad * 2           # a_norm streamed per layer (bf16)
                      + n_pad * C_PAD * 2 + B_PAD * n_pad * 2
                      + params_bytes + B_PAD * C_PAD * 4)

    kernel = functools.partial(_dgcnn_kernel, n=n, n_pad=n_pad, tm=tm,
                               n_layers=n_layers)
    out = pl.pallas_call(
        kernel,
        out_shape=jax.ShapeDtypeStruct((B_PAD, C_PAD), jnp.float32),
        grid_spec=pltpu.PrefetchScalarGridSpec(
            num_scalar_prefetch=0,
            grid=(n_layers, n_tiles),
            in_specs=[
                # a_norm: streamed row tiles (re-streamed once per layer).
                pl.BlockSpec((tm, n_pad), lambda l, t: (t, 0)),
                # input features + pool matrix: resident across the grid.
                pl.BlockSpec((n_pad, C_PAD), lambda l, t: (0, 0)),
                pl.BlockSpec((B_PAD, n_pad), lambda l, t: (0, 0)),
                # per-layer conv / BN params: fetched once per layer.
                pl.BlockSpec((None, C_PAD, C_PAD), lambda l, t: (l, 0, 0)),
                pl.BlockSpec((None, 1, C_PAD), lambda l, t: (l, 0, 0)),
                pl.BlockSpec((None, 1, C_PAD), lambda l, t: (l, 0, 0)),
                pl.BlockSpec((None, 1, C_PAD), lambda l, t: (l, 0, 0)),
                # MLP params: resident across the whole grid.
                pl.BlockSpec(((n_layers + 1) * C_PAD, C_PAD), lambda l, t: (0, 0)),
                pl.BlockSpec((1, C_PAD), lambda l, t: (0, 0)),
                pl.BlockSpec((C_PAD, C_PAD), lambda l, t: (0, 0)),
                pl.BlockSpec((1, C_PAD), lambda l, t: (0, 0)),
                pl.BlockSpec((C_PAD, C_PAD), lambda l, t: (0, 0)),
                pl.BlockSpec((1, C_PAD), lambda l, t: (0, 0)),
            ],
            out_specs=pl.BlockSpec((B_PAD, C_PAD), lambda l, t: (0, 0)),
            scratch_shapes=[
                pltpu.VMEM((n_pad, C_PAD), jnp.bfloat16),   # x_buf: layer input acts
                pltpu.VMEM((n_pad, C_PAD), jnp.float32),    # z_buf: pre-BN acts
                pltpu.VMEM((1, C_PAD), jnp.float32),        # BN column sum
                pltpu.VMEM((1, C_PAD), jnp.float32),        # BN column sum-of-squares
                pltpu.VMEM((B_PAD, (n_layers + 1) * C_PAD), jnp.float32),  # pooled concat
            ]),
        compiler_params=pltpu.CompilerParams(
            # Both axes are carried reductions (global BN stats + layer chain).
            dimension_semantics=("arbitrary", "arbitrary"),
            vmem_limit_bytes=48 * 1024 * 1024),
        cost_estimate=pl.CostEstimate(flops=flops,
                                      transcendentals=n_layers * C_PAD,
                                      bytes_accessed=bytes_accessed),
    )(a_p, h_p, p_p,
      packed["wc"], packed["bc"], packed["gamma"], packed["beta"],
      packed["w1"], packed["b1"], packed["w2"], packed["b2"],
      packed["w3"], packed["b3"])
    # Only lane 0 of the padded output slab is the logical scalar per graph.
    return out[:b, 0]   # == h_graph.view(-1)


# --------------------------- parameter handling ---------------------------- #

def init_dgcnn_params(key, in_dim, hidden_dims=(32, 32, 32, 1)):
    """Logical (unpadded) parameters, matching the torch module structure."""
    params = {"conv": [], "bn": [], "mlp": []}
    dims = [in_dim] + list(hidden_dims)
    for i in range(len(hidden_dims)):
        key, kw, kb = jax.random.split(key, 3)
        w = jax.random.normal(kw, (dims[i], dims[i + 1]), jnp.float32) * 0.1
        bb = jax.random.normal(kb, (1, dims[i + 1]), jnp.float32) * 0.1
        params["conv"].append((w, bb))
        # BatchNorm1d default affine init: gamma = 1, beta = 0
        params["bn"].append((jnp.ones((1, dims[i + 1]), jnp.float32),
                             jnp.zeros((1, dims[i + 1]), jnp.float32)))
    concat_dim = in_dim + sum(hidden_dims)
    # TODO(synk): the reference __init__ declares nn.Linear(hidden_dims[-1]*2, 128)
    # for the first MLP, but forward() feeds it the concatenated feature of width
    # in_dim + sum(hidden_dims) (shape mismatch / missing SortPooling in the
    # original code); we size the first MLP to the actual concat width.
    mlp_dims = [concat_dim, 128, 64, 1]
    for i in range(3):
        key, kw, kb = jax.random.split(key, 3)
        w = jax.random.normal(kw, (mlp_dims[i], mlp_dims[i + 1]), jnp.float32) * 0.1
        bb = jax.random.normal(kb, (1, mlp_dims[i + 1]), jnp.float32) * 0.1
        params["mlp"].append((w, bb))
    return params


def pack_dgcnn_params(params, in_dim, hidden_dims):
    """Zero-pad / stack logical params into lane-dense (128-wide) tensors.

    Zero-padding invariant (correctness-critical): padded lanes of wc, bc,
    gamma and beta MUST be zero so that the padded feature lanes stay exactly
    zero through BN + ReLU and cannot leak into the packed W1 contraction.
    """
    n_layers = len(hidden_dims)
    dims = [in_dim] + list(hidden_dims)

    wc = jnp.zeros((n_layers, C_PAD, C_PAD), jnp.float32)
    bc = jnp.zeros((n_layers, 1, C_PAD), jnp.float32)
    gm = jnp.zeros((n_layers, 1, C_PAD), jnp.float32)
    bt = jnp.zeros((n_layers, 1, C_PAD), jnp.float32)
    for l, ((w, b), (g, be)) in enumerate(zip(params["conv"], params["bn"])):
        wc = wc.at[l, :dims[l], :dims[l + 1]].set(w)
        bc = bc.at[l, :, :dims[l + 1]].set(b)
        gm = gm.at[l, :, :dims[l + 1]].set(g)
        bt = bt.at[l, :, :dims[l + 1]].set(be)

    (w1, b1), (w2, b2), (w3, b3) = params["mlp"]
    # W1 packed as a single [(L+1)*128, 128] matrix: segment s (input features
    # or layer-s output) occupies rows [s*128, s*128 + dims[s]).  The kernel
    # then does ONE K=(L+1)*128 matmul over the pooled concat slab.
    w1p = jnp.zeros(((n_layers + 1) * C_PAD, C_PAD), jnp.float32)
    off = 0
    for s, c in enumerate(dims):
        w1p = w1p.at[s * C_PAD:s * C_PAD + c, :w1.shape[1]].set(w1[off:off + c, :])
        off += c
    b1p = jnp.zeros((1, C_PAD), jnp.float32).at[:, :w1.shape[1]].set(b1)
    w2p = jnp.zeros((C_PAD, C_PAD), jnp.float32).at[:w2.shape[0], :w2.shape[1]].set(w2)
    b2p = jnp.zeros((1, C_PAD), jnp.float32).at[:, :w2.shape[1]].set(b2)
    w3p = jnp.zeros((C_PAD, C_PAD), jnp.float32).at[:w3.shape[0], :w3.shape[1]].set(w3)
    b3p = jnp.zeros((1, C_PAD), jnp.float32).at[:, :w3.shape[1]].set(b3)

    return dict(wc=wc, bc=bc, gamma=gm, beta=bt,
                w1=w1p, b1=b1p, w2=w2p, b2=b2p, w3=w3p, b3=b3p)


# ---------------------- plain-JAX reference (for check) -------------------- #

def dgcnn_reference(params, a_norm, pool, h, *, agg_dtype=jnp.float32):
    """agg_dtype=float32 reproduces the module's full-f32 semantics;
    agg_dtype=bfloat16 mirrors the kernel's deliberate aggregation-operand
    cast (with f32 accumulation) for a tight numerics check."""
    f32 = jnp.float32
    a = a_norm.astype(agg_dtype)
    p = pool.astype(agg_dtype)
    x = h
    h_list = [x]
    for (w, b), (g, be) in zip(params["conv"], params["bn"]):
        agg = jnp.dot(a, x.astype(agg_dtype), preferred_element_type=f32)
        z = agg @ w + b
        mean = z.mean(axis=0, keepdims=True)
        var = ((z - mean) ** 2).mean(axis=0, keepdims=True)
        x = jnp.maximum(g * (z - mean) * jax.lax.rsqrt(var + BN_EPS) + be, 0.0)
        h_list.append(x)
    hg = jnp.dot(p, jnp.concatenate(h_list, axis=1).astype(agg_dtype),
                 preferred_element_type=f32)
    (w1, b1), (w2, b2), (w3, b3) = params["mlp"]
    hg = jnp.maximum(hg @ w1 + b1, 0.0)
    hg = jnp.maximum(hg @ w2 + b2, 0.0)
    return (hg @ w3 + b3).reshape(-1)


# --------------------------------- driver ---------------------------------- #

if __name__ == "__main__":
    N_PER_GRAPH = 30
    B = 2
    N = B * N_PER_GRAPH      # 60 nodes -> padded to 64 (exercises row masking)
    IN_DIM = 16
    HIDDEN_DIMS = (32, 32, 32, 1)
    TM = 32                  # 2 row tiles at toy size; 256-1024 at real sizes

    # Deterministic batched graph: two 30-node undirected rings.
    adj = [[0.0] * N for _ in range(N)]
    for g in range(B):
        base = g * N_PER_GRAPH
        for i in range(N_PER_GRAPH):
            u = base + i
            v = base + (i + 1) % N_PER_GRAPH
            adj[u][v] = 1.0
            adj[v][u] = 1.0
    a_rows = []
    for row in adj:
        deg = sum(row)
        a_rows.append([x / deg if deg > 0 else 0.0 for x in row])
    a_norm = jnp.array(a_rows, dtype=jnp.float32)

    pool = jnp.zeros((B, N), jnp.float32)
    for g in range(B):
        pool = pool.at[g, g * N_PER_GRAPH:(g + 1) * N_PER_GRAPH].set(1.0 / N_PER_GRAPH)

    key = jax.random.PRNGKey(0)
    key, kh, kp = jax.random.split(key, 3)
    h = jax.random.normal(kh, (N, IN_DIM), jnp.float32)
    params = init_dgcnn_params(kp, IN_DIM, HIDDEN_DIMS)
    packed = pack_dgcnn_params(params, IN_DIM, HIDDEN_DIMS)

    fwd = jax.jit(functools.partial(dgcnn_forward, tm=TM))
    out = jax.block_until_ready(fwd(packed, a_norm, pool, h))
    assert out.shape == (B,) and out.dtype == jnp.float32

    # Tight functional check against a numerics-matched reference (same bf16
    # aggregation-operand cast) -- this is what catches real kernel bugs.
    ref_bf = dgcnn_reference(params, a_norm, pool, h, agg_dtype=jnp.bfloat16)
    rel_bf = float(jnp.max(jnp.abs(out - ref_bf)) / (jnp.max(jnp.abs(ref_bf)) + 1e-6))
    assert rel_bf < 5e-3, f"kernel vs bf16-matched reference: rel_err={rel_bf}"

    # Looser sanity bound against the module's full-f32 semantics; the slack
    # only covers the deliberate bf16 cast of the aggregation operands.
    ref_f32 = dgcnn_reference(params, a_norm, pool, h)
    rel_f32 = float(jnp.max(jnp.abs(out - ref_f32)) / (jnp.max(jnp.abs(ref_f32)) + 1e-6))
    assert rel_f32 < 5e-2, f"kernel vs f32 reference: rel_err={rel_f32}"

    print("KERNEL_OK")
</pallas_src>

<mosaic_0001>
module attributes {stable_mosaic.version = 11 : i64} {
  func.func @_dgcnn_kernel(%arg0: i32, %arg1: i32, %arg2: memref<32x64xbf16, #tpu.memory_space<vmem>>, %arg3: memref<64x128xbf16, #tpu.memory_space<vmem>>, %arg4: memref<8x64xbf16, #tpu.memory_space<vmem>>, %arg5: memref<1x128x128xf32, #tpu.memory_space<vmem>>, %arg6: memref<1x1x128xf32, #tpu.memory_space<vmem>>, %arg7: memref<1x1x128xf32, #tpu.memory_space<vmem>>, %arg8: memref<1x1x128xf32, #tpu.memory_space<vmem>>, %arg9: memref<640x128xf32, #tpu.memory_space<vmem>>, %arg10: memref<1x128xf32, #tpu.memory_space<vmem>>, %arg11: memref<128x128xf32, #tpu.memory_space<vmem>>, %arg12: memref<1x128xf32, #tpu.memory_space<vmem>>, %arg13: memref<128x128xf32, #tpu.memory_space<vmem>>, %arg14: memref<1x128xf32, #tpu.memory_space<vmem>>, %arg15: memref<8x128xf32, #tpu.memory_space<vmem>>, %arg16: memref<64x128xbf16, #tpu.memory_space<vmem>>, %arg17: memref<64x128xf32, #tpu.memory_space<vmem>>, %arg18: memref<1x128xf32, #tpu.memory_space<vmem>>, %arg19: memref<1x128xf32, #tpu.memory_space<vmem>>, %arg20: memref<8x640xf32, #tpu.memory_space<vmem>>) attributes {dimension_semantics = [#tpu.dimension_semantics<arbitrary>, #tpu.dimension_semantics<arbitrary>], iteration_bounds = array<i64: 4, 2>, scalar_prefetch = 0 : i64, scratch_operands = 5 : i64, tpu.core_type = #tpu.core_type<tc>, window_params = [{transform_indices = @transform_0, window_bounds = array<i64: 32, 64>}, {pipeline_mode = #tpu.pipeline_mode<synchronous>, transform_indices = @transform_1, window_bounds = array<i64: 64, 128>}, {pipeline_mode = #tpu.pipeline_mode<synchronous>, transform_indices = @transform_2, window_bounds = array<i64: 8, 64>}, {transform_indices = @transform_3, window_bounds = array<i64: 1, 128, 128>}, {transform_indices = @transform_4, window_bounds = array<i64: 1, 1, 128>}, {transform_indices = @transform_5, window_bounds = array<i64: 1, 1, 128>}, {transform_indices = @transform_6, window_bounds = array<i64: 1, 1, 128>}, {pipeline_mode = #tpu.pipeline_mode<synchronous>, transform_indices = @transform_7, window_bounds = array<i64: 640, 128>}, {pipeline_mode = #tpu.pipeline_mode<synchronous>, transform_indices = @transform_8, window_bounds = array<i64: 1, 128>}, {pipeline_mode = #tpu.pipeline_mode<synchronous>, transform_indices = @transform_9, window_bounds = array<i64: 128, 128>}, {pipeline_mode = #tpu.pipeline_mode<synchronous>, transform_indices = @transform_10, window_bounds = array<i64: 1, 128>}, {pipeline_mode = #tpu.pipeline_mode<synchronous>, transform_indices = @transform_11, window_bounds = array<i64: 128, 128>}, {pipeline_mode = #tpu.pipeline_mode<synchronous>, transform_indices = @transform_12, window_bounds = array<i64: 1, 128>}, {pipeline_mode = #tpu.pipeline_mode<synchronous>, transform_indices = @transform_13, window_bounds = array<i64: 8, 128>}]} {
    %c0_i32 = arith.constant 0 : i32
    %0 = arith.cmpi eq, %arg1, %c0_i32 : i32
    %1 = arith.extui %0 : i1 to i32
    %c0_i32_0 = arith.constant 0 : i32
    %2 = arith.cmpi ne, %1, %c0_i32_0 : i32
    scf.if %2 {
      %cst_28 = arith.constant 0.000000e+00 : f32
      %46 = vector.broadcast %cst_28 : f32 to vector<1x128xf32>
      %c0_29 = arith.constant 0 : index
      %c0_30 = arith.constant 0 : index
      %47 = vector.load %arg18[%c0_29, %c0_30] : memref<1x128xf32, #tpu.memory_space<vmem>>, vector<1x128xf32>
      tpu.vector_store %arg18[%c0_29, %c0_30], %46 {strides = array<i32>} : memref<1x128xf32, #tpu.memory_space<vmem>>, vector<1x128xf32>,
      %cst_31 = arith.constant 0.000000e+00 : f32
      %48 = vector.broadcast %cst_31 : f32 to vector<1x128xf32>
      %c0_32 = arith.constant 0 : index
      %c0_33 = arith.constant 0 : index
      %49 = vector.load %arg19[%c0_32, %c0_33] : memref<1x128xf32, #tpu.memory_space<vmem>>, vector<1x128xf32>
      tpu.vector_store %arg19[%c0_32, %c0_33], %48 {strides = array<i32>} : memref<1x128xf32, #tpu.memory_space<vmem>>, vector<1x128xf32>,
    } else {
    }
    %c0_i32_1 = arith.constant 0 : i32
    %3 = arith.cmpi eq, %arg0, %c0_i32_1 : i32
    %c0_i32_2 = arith.constant 0 : i32
    %4 = arith.cmpi eq, %arg1, %c0_i32_2 : i32
    %5 = arith.andi %3, %4 : i1
    %6 = arith.extui %5 : i1 to i32
    %c0_i32_3 = arith.constant 0 : i32
    %7 = arith.cmpi ne, %6, %c0_i32_3 : i32
    scf.if %7 {
      %c0_28 = arith.constant 0 : index
      %c0_29 = arith.constant 0 : index
      %46 = vector.load %arg3[%c0_28, %c0_29] : memref<64x128xbf16, #tpu.memory_space<vmem>>, vector<64x128xbf16>
      %c0_30 = arith.constant 0 : index
      %c0_31 = arith.constant 0 : index
      %47 = vector.load %arg16[%c0_30, %c0_31] : memref<64x128xbf16, #tpu.memory_space<vmem>>, vector<64x128xbf16>
      tpu.vector_store %arg16[%c0_30, %c0_31], %46 {strides = array<i32>} : memref<64x128xbf16, #tpu.memory_space<vmem>>, vector<64x128xbf16>,
      %cst_32 = arith.constant 0.000000e+00 : f32
      %48 = vector.broadcast %cst_32 : f32 to vector<8x640xf32>
      %c0_33 = arith.constant 0 : index
      %c0_34 = arith.constant 0 : index
      %49 = vector.load %arg20[%c0_33, %c0_34] : memref<8x640xf32, #tpu.memory_space<vmem>>, vector<8x640xf32>
      tpu.vector_store %arg20[%c0_33, %c0_34], %48 {strides = array<i32>} : memref<8x640xf32, #tpu.memory_space<vmem>>, vector<8x640xf32>,
      %c0_35 = arith.constant 0 : index
      %c0_36 = arith.constant 0 : index
      %50 = vector.load %arg4[%c0_35, %c0_36] : memref<8x64xbf16, #tpu.memory_space<vmem>>, vector<8x64xbf16>
      %c0_37 = arith.constant 0 : index
      %c0_38 = arith.constant 0 : index
      %51 = vector.load %arg3[%c0_37, %c0_38] : memref<64x128xbf16, #tpu.memory_space<vmem>>, vector<64x128xbf16>
      %cst_39 = arith.constant dense<0.000000e+00> : vector<8x128xf32>
      %52 = tpu.matmul %50, %51, %cst_39 {dimension_numbers = #tpu.dot_dimension_numbers<[1], [0], [0], [1], [0, 0, 1, 1], [], []>} : vector<8x64xbf16>, vector<64x128xbf16>, vector<8x128xf32> -> vector<8x128xf32>
      %c0_40 = arith.constant 0 : index
      %c0_41 = arith.constant 0 : index
      %53 = vector.load %arg20[%c0_40, %c0_41] : memref<8x640xf32, #tpu.memory_space<vmem>>, vector<8x128xf32>
      tpu.vector_store %arg20[%c0_40, %c0_41], %52 {strides = array<i32>} : memref<8x640xf32, #tpu.memory_space<vmem>>, vector<8x128xf32>,
    } else {
    }
    %c0 = arith.constant 0 : index
    %c0_4 = arith.constant 0 : index
    %8 = vector.load %arg2[%c0, %c0_4] : memref<32x64xbf16, #tpu.memory_space<vmem>>, vector<32x64xbf16>
    %c0_5 = arith.constant 0 : index
    %c0_6 = arith.constant 0 : index
    %9 = vector.load %arg16[%c0_5, %c0_6] : memref<64x128xbf16, #tpu.memory_space<vmem>>, vector<64x128xbf16>
    %cst = arith.constant dense<0.000000e+00> : vector<32x128xf32>
    %10 = tpu.matmul %8, %9, %cst {dimension_numbers = #tpu.dot_dimension_numbers<[1], [0], [0], [1], [0, 0, 1, 1], [], []>} : vector<32x64xbf16>, vector<64x128xbf16>, vector<32x128xf32> -> vector<32x128xf32>
    %c0_7 = arith.constant 0 : index
    %c0_8 = arith.constant 0 : index
    %c0_9 = arith.constant 0 : index
    %11 = vector.load %arg5[%c0_7, %c0_8, %c0_9] : memref<1x128x128xf32, #tpu.memory_space<vmem>>, vector<1x128x128xf32>
    %12 = vector.shape_cast %11 : vector<1x128x128xf32> to vector<128x128xf32>
    %cst_10 = arith.constant dense<0.000000e+00> : vector<32x128xf32>
    %13 = tpu.matmul %10, %12, %cst_10 {dimension_numbers = #tpu.dot_dimension_numbers<[1], [0], [0], [1], [0, 0, 1, 1], [], []>} : vector<32x128xf32>, vector<128x128xf32>, vector<32x128xf32> -> vector<32x128xf32>
    %c0_11 = arith.constant 0 : index
    %c0_12 = arith.constant 0 : index
    %c0_13 = arith.constant 0 : index
    %14 = vector.load %arg6[%c0_11, %c0_12, %c0_13] : memref<1x1x128xf32, #tpu.memory_space<vmem>>, vector<1x1x128xf32>
    %15 = vector.shape_cast %14 : vector<1x1x128xf32> to vector<1x128xf32>
    %16 = vector.broadcast %15 : vector<1x128xf32> to vector<32x128xf32>
    %17 = arith.addf %13, %16 : vector<32x128xf32>
    %c32_i32 = arith.constant 32 : i32
    %18 = arith.muli %arg1, %c32_i32 : i32
    %19 = tpu.iota {dimensions = array<i32: 0>} : vector<32x1xi32>
    %20 = vector.broadcast %18 : i32 to vector<32x1xi32>
    %21 = arith.addi %20, %19 : vector<32x1xi32>
    %c60_i32 = arith.constant 60 : i32
    %22 = vector.broadcast %c60_i32 : i32 to vector<32x1xi32>
    %23 = arith.cmpi slt, %21, %22 : vector<32x1xi32>
    %cst_14 = arith.constant 0.000000e+00 : f32
    %24 = vector.shape_cast %23 : vector<32x1xi1> to vector<32x1xi1>
    %25 = vector.broadcast %24 : vector<32x1xi1> to vector<32x128xi1>
    %26 = vector.broadcast %cst_14 : f32 to vector<32x128xf32>
    %27 = arith.select %25, %17, %26 : vector<32x128xi1>, vector<32x128xf32>
    %c32_i32_15 = arith.constant 32 : i32
    %28 = arith.muli %arg1, %c32_i32_15 : i32
    %29 = tpu.assume_multiple %28, 32 : i32
    %30 = arith.index_cast %29 : i32 to index
    %c0_16 = arith.constant 0 : index
    %31 = vector.load %arg17[%30, %c0_16] : memref<64x128xf32, #tpu.memory_space<vmem>>, vector<32x128xf32>
    tpu.vector_store %arg17[%30, %c0_16], %27 {strides = array<i32>} : memref<64x128xf32, #tpu.memory_space<vmem>>, vector<32x128xf32>,
    %c0_17 = arith.constant 0 : index
    %c0_18 = arith.constant 0 : index
    %32 = vector.load %arg18[%c0_17, %c0_18] : memref<1x128xf32, #tpu.memory_space<vmem>>, vector<1x128xf32>
    %cst_19 = arith.constant dense<0.000000e+00> : vector<128xf32>
    %33 = vector.multi_reduction <add>, %27, %cst_19 [0] : vector<32x128xf32> to vector<128xf32>
    %34 = vector.shape_cast %33 : vector<128xf32> to vector<1x128xf32>
    %35 = arith.addf %32, %34 : vector<1x128xf32>
    %c0_20 = arith.constant 0 : index
    %c0_21 = arith.constant 0 : index
    %36 = vector.load %arg18[%c0_20, %c0_21] : memref<1x128xf32, #tpu.memory_space<vmem>>, vector<1x128xf32>
    tpu.vector_store %arg18[%c0_20, %c0_21], %35 {strides = array<i32>} : memref<1x128xf32, #tpu.memory_space<vmem>>, vector<1x128xf32>,
    %c0_22 = arith.constant 0 : index
    %c0_23 = arith.constant 0 : index
    %37 = vector.load %arg19[%c0_22, %c0_23] : memref<1x128xf32, #tpu.memory_space<vmem>>, vector<1x128xf32>
    %38 = arith.mulf %27, %27 : vector<32x128xf32>
    %cst_24 = arith.constant dense<0.000000e+00> : vector<128xf32>
    %39 = vector.multi_reduction <add>, %38, %cst_24 [0] : vector<32x128xf32> to vector<128xf32>
    %40 = vector.shape_cast %39 : vector<128xf32> to vector<1x128xf32>
    %41 = arith.addf %37, %40 : vector<1x128xf32>
    %c0_25 = arith.constant 0 : index
    %c0_26 = arith.constant 0 : index
    %42 = vector.load %arg19[%c0_25, %c0_26] : memref<1x128xf32, #tpu.memory_space<vmem>>, vector<1x128xf32>
    tpu.vector_store %arg19[%c0_25, %c0_26], %41 {strides = array<i32>} : memref<1x128xf32, #tpu.memory_space<vmem>>, vector<1x128xf32>,
    %c1_i32 = arith.constant 1 : i32
    %43 = arith.cmpi eq, %arg1, %c1_i32 : i32
    %44 = arith.extui %43 : i1 to i32
    %c0_i32_27 = arith.constant 0 : i32
    %45 = arith.cmpi ne, %44, %c0_i32_27 : i32
    scf.if %45 {
      %c0_28 = arith.constant 0 : index
      %c0_29 = arith.constant 0 : index
      %46 = vector.load %arg18[%c0_28, %c0_29] : memref<1x128xf32, #tpu.memory_space<vmem>>, vector<1x128xf32>
      %cst_30 = arith.constant 0.0166666675 : f32
      %47 = vector.broadcast %cst_30 : f32 to vector<1x128xf32>
      %48 = arith.mulf %46, %47 : vector<1x128xf32>
      %c0_31 = arith.constant 0 : index
      %c0_32 = arith.constant 0 : index
      %49 = vector.load %arg19[%c0_31, %c0_32] : memref<1x128xf32, #tpu.memory_space<vmem>>, vector<1x128xf32>
      %cst_33 = arith.constant 0.0166666675 : f32
      %50 = vector.broadcast %cst_33 : f32 to vector<1x128xf32>
      %51 = arith.mulf %49, %50 : vector<1x128xf32>
      %52 = arith.mulf %48, %48 : vector<1x128xf32>
      %53 = arith.subf %51, %52 : vector<1x128xf32>
      %c0_34 = arith.constant 0 : index
      %c0_35 = arith.constant 0 : index
      %c0_36 = arith.constant 0 : index
      %54 = vector.load %arg7[%c0_34, %c0_35, %c0_36] : memref<1x1x128xf32, #tpu.memory_space<vmem>>, vector<1x1x128xf32>
      %55 = vector.shape_cast %54 : vector<1x1x128xf32> to vector<1x128xf32>
      %cst_37 = arith.constant 9.99999974E-6 : f32
      %56 = vector.broadcast %cst_37 : f32 to vector<1x128xf32>
      %57 = arith.addf %53, %56 : vector<1x128xf32>
      %58 = math.rsqrt %57 : vector<1x128xf32>
      %59 = arith.mulf %55, %58 : vector<1x128xf32>
      %c0_38 = arith.constant 0 : index
      %c0_39 = arith.constant 0 : index
      %c0_40 = arith.constant 0 : index
      %60 = vector.load %arg8[%c0_38, %c0_39, %c0_40] : memref<1x1x128xf32, #tpu.memory_space<vmem>>, vector<1x1x128xf32>
      %61 = vector.shape_cast %60 : vector<1x1x128xf32> to vector<1x128xf32>
      %62 = arith.mulf %48, %59 : vector<1x128xf32>
      %63 = arith.subf %61, %62 : vector<1x128xf32>
      %c0_41 = arith.constant 0 : index
      %c0_42 = arith.constant 0 : index
      %64 = vector.load %arg17[%c0_41, %c0_42] : memref<64x128xf32, #tpu.memory_space<vmem>>, vector<64x128xf32>
      %65 = vector.broadcast %59 : vector<1x128xf32> to vector<64x128xf32>
      %66 = arith.mulf %64, %65 : vector<64x128xf32>
      %67 = vector.broadcast %63 : vector<1x128xf32> to vector<64x128xf32>
      %68 = arith.addf %66, %67 : vector<64x128xf32>
      %cst_43 = arith.constant 0.000000e+00 : f32
      %69 = vector.broadcast %cst_43 : f32 to vector<64x128xf32>
      %70 = arith.maximumf %68, %69 : vector<64x128xf32>
      %71 = arith.truncf %70 : vector<64x128xf32> to vector<64x128xbf16>
      %c0_44 = arith.constant 0 : index
      %c0_45 = arith.constant 0 : index
      %72 = vector.load %arg16[%c0_44, %c0_45] : memref<64x128xbf16, #tpu.memory_space<vmem>>, vector<64x128xbf16>
      tpu.vector_store %arg16[%c0_44, %c0_45], %71 {strides = array<i32>} : memref<64x128xbf16, #tpu.memory_space<vmem>>, vector<64x128xbf16>,
      %c0_46 = arith.constant 0 : index
      %c0_47 = arith.constant 0 : index
      %73 = vector.load %arg4[%c0_46, %c0_47] : memref<8x64xbf16, #tpu.memory_space<vmem>>, vector<8x64xbf16>
      %cst_48 = arith.constant dense<0.000000e+00> : vector<8x128xf32>
      %74 = tpu.matmul %73, %71, %cst_48 {dimension_numbers = #tpu.dot_dimension_numbers<[1], [0], [0], [1], [0, 0, 1, 1], [], []>} : vector<8x64xbf16>, vector<64x128xbf16>, vector<8x128xf32> -> vector<8x128xf32>
      %c0_i32_49 = arith.constant 0 : i32
      %75 = arith.cmpi eq, %arg0, %c0_i32_49 : i32
      %76 = arith.extui %75 : i1 to i32
      %c0_i32_50 = arith.constant 0 : i32
      %77 = arith.cmpi ne, %76, %c0_i32_50 : i32
      scf.if %77 {
        %c0_57 = arith.constant 0 : index
        %c128 = arith.constant 128 : index
        %90 = vector.load %arg20[%c0_57, %c128] : memref<8x640xf32, #tpu.memory_space<vmem>>, vector<8x128xf32>
        tpu.vector_store %arg20[%c0_57, %c128], %74 {strides = array<i32>} : memref<8x640xf32, #tpu.memory_space<vmem>>, vector<8x128xf32>,
      } else {
      }
      %c1_i32_51 = arith.constant 1 : i32
      %78 = arith.cmpi eq, %arg0, %c1_i32_51 : i32
      %79 = arith.extui %78 : i1 to i32
      %c0_i32_52 = arith.constant 0 : i32
      %80 = arith.cmpi ne, %79, %c0_i32_52 : i32
      scf.if %80 {
        %c0_57 = arith.constant 0 : index
        %c256 = arith.constant 256 : index
        %90 = vector.load %arg20[%c0_57, %c256] : memref<8x640xf32, #tpu.memory_space<vmem>>, vector<8x128xf32>
        tpu.vector_store %arg20[%c0_57, %c256], %74 {strides = array<i32>} : memref<8x640xf32, #tpu.memory_space<vmem>>, vector<8x128xf32>,
      } else {
      }
      %c2_i32 = arith.constant 2 : i32
      %81 = arith.cmpi eq, %arg0, %c2_i32 : i32
      %82 = arith.extui %81 : i1 to i32
      %c0_i32_53 = arith.constant 0 : i32
      %83 = arith.cmpi ne, %82, %c0_i32_53 : i32
      scf.if %83 {
        %c0_57 = arith.constant 0 : index
        %c384 = arith.constant 384 : index
        %90 = vector.load %arg20[%c0_57, %c384] : memref<8x640xf32, #tpu.memory_space<vmem>>, vector<8x128xf32>
        tpu.vector_store %arg20[%c0_57, %c384], %74 {strides = array<i32>} : memref<8x640xf32, #tpu.memory_space<vmem>>, vector<8x128xf32>,
      } else {
      }
      %c3_i32 = arith.constant 3 : i32
      %84 = arith.cmpi eq, %arg0, %c3_i32 : i32
      %85 = arith.extui %84 : i1 to i32
      %c0_i32_54 = arith.constant 0 : i32
      %86 = arith.cmpi ne, %85, %c0_i32_54 : i32
      scf.if %86 {
        %c0_57 = arith.constant 0 : index
        %c512 = arith.constant 512 : index
        %90 = vector.load %arg20[%c0_57, %c512] : memref<8x640xf32, #tpu.memory_space<vmem>>, vector<8x128xf32>
        tpu.vector_store %arg20[%c0_57, %c512], %74 {strides = array<i32>} : memref<8x640xf32, #tpu.memory_space<vmem>>, vector<8x128xf32>,
      } else {
      }
      %c3_i32_55 = arith.constant 3 : i32
      %87 = arith.cmpi eq, %arg0, %c3_i32_55 : i32
      %88 = arith.extui %87 : i1 to i32
      %c0_i32_56 = arith.constant 0 : i32
      %89 = arith.cmpi ne, %88, %c0_i32_56 : i32
      scf.if %89 {
        %c0_57 = arith.constant 0 : index
        %c0_58 = arith.constant 0 : index
        %90 = vector.load %arg20[%c0_57, %c0_58] : memref<8x640xf32, #tpu.memory_space<vmem>>, vector<8x640xf32>
        %c0_59 = arith.constant 0 : index
        %c0_60 = arith.constant 0 : index
        %91 = vector.load %arg9[%c0_59, %c0_60] : memref<640x128xf32, #tpu.memory_space<vmem>>, vector<640x128xf32>
        %cst_61 = arith.constant dense<0.000000e+00> : vector<8x128xf32>
        %92 = tpu.matmul %90, %91, %cst_61 {dimension_numbers = #tpu.dot_dimension_numbers<[1], [0], [0], [1], [0, 0, 1, 1], [], []>} : vector<8x640xf32>, vector<640x128xf32>, vector<8x128xf32> -> vector<8x128xf32>
        %c0_62 = arith.constant 0 : index
        %c0_63 = arith.constant 0 : index
        %93 = vector.load %arg10[%c0_62, %c0_63] : memref<1x128xf32, #tpu.memory_space<vmem>>, vector<1x128xf32>
        %94 = vector.broadcast %93 : vector<1x128xf32> to vector<8x128xf32>
        %95 = arith.addf %92, %94 : vector<8x128xf32>
        %cst_64 = arith.constant 0.000000e+00 : f32
        %96 = vector.broadcast %cst_64 : f32 to vector<8x128xf32>
        %97 = arith.maximumf %95, %96 : vector<8x128xf32>
        %c0_65 = arith.constant 0 : index
        %c0_66 = arith.constant 0 : index
        %98 = vector.load %arg11[%c0_65, %c0_66] : memref<128x128xf32, #tpu.memory_space<vmem>>, vector<128x128xf32>
        %cst_67 = arith.constant dense<0.000000e+00> : vector<8x128xf32>
        %99 = tpu.matmul %97, %98, %cst_67 {dimension_numbers = #tpu.dot_dimension_numbers<[1], [0], [0], [1], [0, 0, 1, 1], [], []>} : vector<8x128xf32>, vector<128x128xf32>, vector<8x128xf32> -> vector<8x128xf32>
        %c0_68 = arith.constant 0 : index
        %c0_69 = arith.constant 0 : index
        %100 = vector.load %arg12[%c0_68, %c0_69] : memref<1x128xf32, #tpu.memory_space<vmem>>, vector<1x128xf32>
        %101 = vector.broadcast %100 : vector<1x128xf32> to vector<8x128xf32>
        %102 = arith.addf %99, %101 : vector<8x128xf32>
        %cst_70 = arith.constant 0.000000e+00 : f32
        %103 = vector.broadcast %cst_70 : f32 to vector<8x128xf32>
        %104 = arith.maximumf %102, %103 : vector<8x128xf32>
        %c0_71 = arith.constant 0 : index
        %c0_72 = arith.constant 0 : index
        %105 = vector.load %arg13[%c0_71, %c0_72] : memref<128x128xf32, #tpu.memory_space<vmem>>, vector<128x128xf32>
        %cst_73 = arith.constant dense<0.000000e+00> : vector<8x128xf32>
        %106 = tpu.matmul %104, %105, %cst_73 {dimension_numbers = #tpu.dot_dimension_numbers<[1], [0], [0], [1], [0, 0, 1, 1], [], []>} : vector<8x128xf32>, vector<128x128xf32>, vector<8x128xf32> -> vector<8x128xf32>
        %c0_74 = arith.constant 0 : index
        %c0_75 = arith.constant 0 : index
        %107 = vector.load %arg14[%c0_74, %c0_75] : memref<1x128xf32, #tpu.memory_space<vmem>>, vector<1x128xf32>
        %108 = vector.broadcast %107 : vector<1x128xf32> to vector<8x128xf32>
        %109 = arith.addf %106, %108 : vector<8x128xf32>
        %c0_76 = arith.constant 0 : index
        %c0_77 = arith.constant 0 : index
        %110 = vector.load %arg15[%c0_76, %c0_77] : memref<8x128xf32, #tpu.memory_space<vmem>>, vector<8x128xf32>
        tpu.vector_store %arg15[%c0_76, %c0_77], %109 {strides = array<i32>} : memref<8x128xf32, #tpu.memory_space<vmem>>, vector<8x128xf32>,
      } else {
      }
    } else {
    }
    return
  }
  func.func @transform_0(%arg0: i32, %arg1: i32) -> (i32, i32) {
    %c0_i32 = arith.constant 0 : i32
    %c0_i32_0 = arith.constant 0 : i32
    return %arg1, %c0_i32 : i32, i32
  }
  func.func @transform_1(%arg0: i32, %arg1: i32) -> (i32, i32) {
    %c0_i32 = arith.constant 0 : i32
    %c0_i32_0 = arith.constant 0 : i32
    %c0_i32_1 = arith.constant 0 : i32
    return %c0_i32, %c0_i32_0 : i32, i32
  }
  func.func @transform_2(%arg0: i32, %arg1: i32) -> (i32, i32) {
    %c0_i32 = arith.constant 0 : i32
    %c0_i32_0 = arith.constant 0 : i32
    %c0_i32_1 = arith.constant 0 : i32
    return %c0_i32, %c0_i32_0 : i32, i32
  }
  func.func @transform_3(%arg0: i32, %arg1: i32) -> (i32, i32, i32) {
    %c0_i32 = arith.constant 0 : i32
    %c0_i32_0 = arith.constant 0 : i32
    %c0_i32_1 = arith.constant 0 : i32
    return %arg0, %c0_i32, %c0_i32_0 : i32, i32, i32
  }
  func.func @transform_4(%arg0: i32, %arg1: i32) -> (i32, i32, i32) {
    %c0_i32 = arith.constant 0 : i32
    %c0_i32_0 = arith.constant 0 : i32
    %c0_i32_1 = arith.constant 0 : i32
    return %arg0, %c0_i32, %c0_i32_0 : i32, i32, i32
  }
  func.func @transform_5(%arg0: i32, %arg1: i32) -> (i32, i32, i32) {
    %c0_i32 = arith.constant 0 : i32
    %c0_i32_0 = arith.constant 0 : i32
    %c0_i32_1 = arith.constant 0 : i32
    return %arg0, %c0_i32, %c0_i32_0 : i32, i32, i32
  }
  func.func @transform_6(%arg0: i32, %arg1: i32) -> (i32, i32, i32) {
    %c0_i32 = arith.constant 0 : i32
    %c0_i32_0 = arith.constant 0 : i32
    %c0_i32_1 = arith.constant 0 : i32
    return %arg0, %c0_i32, %c0_i32_0 : i32, i32, i32
  }
  func.func @transform_7(%arg0: i32, %arg1: i32) -> (i32, i32) {
    %c0_i32 = arith.constant 0 : i32
    %c0_i32_0 = arith.constant 0 : i32
    %c0_i32_1 = arith.constant 0 : i32
    return %c0_i32, %c0_i32_0 : i32, i32
  }
  func.func @transform_8(%arg0: i32, %arg1: i32) -> (i32, i32) {
    %c0_i32 = arith.constant 0 : i32
    %c0_i32_0 = arith.constant 0 : i32
    %c0_i32_1 = arith.constant 0 : i32
    return %c0_i32, %c0_i32_0 : i32, i32
  }
  func.func @transform_9(%arg0: i32, %arg1: i32) -> (i32, i32) {
    %c0_i32 = arith.constant 0 : i32
    %c0_i32_0 = arith.constant 0 : i32
    %c0_i32_1 = arith.constant 0 : i32
    return %c0_i32, %c0_i32_0 : i32, i32
  }
  func.func @transform_10(%arg0: i32, %arg1: i32) -> (i32, i32) {
    %c0_i32 = arith.constant 0 : i32
    %c0_i32_0 = arith.constant 0 : i32
    %c0_i32_1 = arith.constant 0 : i32
    return %c0_i32, %c0_i32_0 : i32, i32
  }
  func.func @transform_11(%arg0: i32, %arg1: i32) -> (i32, i32) {
    %c0_i32 = arith.constant 0 : i32
    %c0_i32_0 = arith.constant 0 : i32
    %c0_i32_1 = arith.constant 0 : i32
    return %c0_i32, %c0_i32_0 : i32, i32
  }
  func.func @transform_12(%arg0: i32, %arg1: i32) -> (i32, i32) {
    %c0_i32 = arith.constant 0 : i32
    %c0_i32_0 = arith.constant 0 : i32
    %c0_i32_1 = arith.constant 0 : i32
    return %c0_i32, %c0_i32_0 : i32, i32
  }
  func.func @transform_13(%arg0: i32, %arg1: i32) -> (i32, i32) {
    %c0_i32 = arith.constant 0 : i32
    %c0_i32_0 = arith.constant 0 : i32
    %c0_i32_1 = arith.constant 0 : i32
    return %c0_i32, %c0_i32_0 : i32, i32
  }
}

</mosaic_0001>

<llo_original>
// kernel: dgcnn_forward.1
$region0: #{dgcnn_forward.1}
  #allocation0 [shape = 'u32[]', space=smem, size = 0x4, offset = 0x4, fixed_abs, tag = 'smem constant byte address 0x4 - core index']
  #allocation1 [shape = 'u32[144,128]{1,0:T(1,128)}', space=vmem, size = 0x12000, scoped, tag = 'internal scratch']
  #allocation2 [shape = 'bf16[64,128]{1,0:T(16,128)(2,1)}', space=vmem, size = 0x4000, scoped, tag = 'scratch operand']
  #allocation3 [shape = 'f32[64,128]{1,0:T(8,128)}', space=vmem, size = 0x8000, scoped, tag = 'scratch operand']
  #allocation4 [shape = 'f32[1,128]{1,0:T(1,128)}', space=vmem, size = 0x200, scoped, tag = 'scratch operand']
  #allocation5 [shape = 'f32[1,128]{1,0:T(1,128)}', space=vmem, size = 0x200, scoped, tag = 'scratch operand']
  #allocation6 [shape = 'f32[8,640]{1,0:T(8,128)}', space=vmem, size = 0x5000, scoped, tag = 'scratch operand']
  %s0 = inlined_call_operand.vmem [shape: bf16[64,64], index: 0, kind: input, shape index: {}]
  %s1 = inlined_call_operand.vmem [shape: bf16[64,128], index: 1, kind: input, shape index: {}]
  %s2 = inlined_call_operand.vmem [shape: bf16[8,64], index: 2, kind: input, shape index: {}]
  %s3 = inlined_call_operand.hbm [shape: f32[4,128,128], index: 3, kind: input, shape index: {}]
  %s4 = inlined_call_operand.hbm [shape: f32[4,1,128], index: 4, kind: input, shape index: {}]
  %s5 = inlined_call_operand.hbm [shape: f32[4,1,128], index: 5, kind: input, shape index: {}]
  %s6 = inlined_call_operand.hbm [shape: f32[4,1,128], index: 6, kind: input, shape index: {}]
  %s7 = inlined_call_operand.hbm [shape: f32[640,128], index: 7, kind: input, shape index: {}]
  %s8 = inlined_call_operand.vmem [shape: f32[1,128], index: 8, kind: input, shape index: {}]
  %s9 = inlined_call_operand.vmem [shape: f32[128,128], index: 9, kind: input, shape index: {}]
  %s10 = inlined_call_operand.hbm [shape: f32[1,128], index: 10, kind: input, shape index: {}]
  %s11 = inlined_call_operand.vmem [shape: f32[128,128], index: 11, kind: input, shape index: {}]
  %s12 = inlined_call_operand.hbm [shape: f32[1,128], index: 12, kind: input, shape index: {}]
  %s13 = inlined_call_operand.vmem [shape: f32[8,128], index: 13, kind: output, shape index: {}]
  %s14 = sld [smem:[#allocation0]]
  $region141: #{dgcnn_forward.1} parent=0
    _
  %s16 = ssub.s32 1, %s14
  %s17 = scalar_select 0, %s16, %s14
  $region1: #{dgcnn_forward.1} parent=0
    #allocation7 [shape = 'u8[131072]{0}', space=vmem, size = 0x20000, scoped, tag = 'input window, operand 3']
    #allocation8 [shape = 's32[2]{0}', space=sflag, size = 0x8, scoped, tag = 'scoped memory for dgcnn_forward.1']
    #allocation9 [shape = 'u8[1024]{0}', space=vmem, size = 0x400, scoped, tag = 'input window, operand 4']
    #allocation10 [shape = 's32[2]{0}', space=sflag, size = 0x8, scoped, tag = 'scoped memory for dgcnn_forward.1']
    #allocation11 [shape = 'u8[1024]{0}', space=vmem, size = 0x400, scoped, tag = 'input window, operand 5']
    #allocation12 [shape = 'u8[1024]{0}', space=vmem, size = 0x400, scoped, tag = 'input window, operand 6']
    #allocation13 [shape = 's32[2]{0}', space=sflag, size = 0x8, scoped, tag = 'scoped memory for dgcnn_forward.1']
    #allocation14 [shape = 'u8[327680]{0}', space=vmem, size = 0x50000, scoped, tag = 'input window, operand 7, single buffered']
    #allocation15 [shape = 'u8[512]{0}', space=vmem, size = 0x400, scoped, tag = 'input window, operand 10, single buffered']
    #allocation16 [shape = 's32[1]{0}', space=sflag, size = 0x4, scoped, tag = 'scoped memory for dgcnn_forward.1']
    #allocation17 [shape = 'u8[512]{0}', space=vmem, size = 0x400, scoped, tag = 'input window, operand 12, single buffered']
    %18 = vsyncpa [#allocation8], 0
    %s19 = scalar_lea.sflag [#allocation8], 1
    %20 = vsyncpa %s19, 0
    %21 = vsyncpa [#allocation10], 0
    %s22 = scalar_lea.sflag [#allocation10], 1
    %23 = vsyncpa %s22, 0
    %24 = vsyncpa [#allocation13], 0
    %s25 = scalar_lea.sflag [#allocation13], 1
    %26 = vsyncpa %s25, 0
    %27 = vsyncpa [#allocation16], 0
    loop: start=0, step=1, limit=10
    $region2: #{dgcnn_forward.1} parent=1 // loop_pre_header
      _
    $region3: #{dgcnn_forward.1} parent=1 // loop_header
      %s29 = sphi 0, %s33
      %p30 = scmp.ge.s32.totalorder %s29, 10
      %s36 = sphi 0, %s48
      %s37 = sphi 0, %s44
      %s38 = sphi 0, %s36
      %s39 = sphi 0, %s37
      %s40 = sphi 0, %s38
      %s41 = sphi 0, %s39
      %s51 = sphi 0, %s53
      %s54 = sphi 0, %s51
      %s55 = sphi 0, %s54
      %s71 = sphi 0, %s55
      %s75 = sphi 0, %s75
      %s77 = sphi 0, %s75
      %s78 = sphi 0, %s77
      %s92 = sphi 0, %s78
      %s96 = sphi 0, %s96
      %s98 = sphi 0, %s96
      %s99 = sphi 0, %s98
      %s113 = sphi 0, %s99
      %s119 = sphi 0, %s121
      %s122 = sphi 0, %s119
      %s123 = sphi 0, %s122
      %s139 = sphi 0, %s123
      %s145 = sphi 0, %s147
      %s148 = sphi 0, %s145
      %s149 = sphi 0, %s148
      %s165 = sphi 0, %s149
      %s171 = sphi 0, %s173
      %s174 = sphi 0, %s171
      %s175 = sphi 0, %s174
      %s191 = sphi 0, %s175
      %s197 = sphi 0, %s199
      %s200 = sphi 0, %s197
      %s201 = sphi 0, %s200
      %s217 = sphi 0, %s201
      %s221 = sphi 0, %s221
      %s223 = sphi 0, %s221
      %s224 = sphi 0, %s223
      %s238 = sphi 0, %s224
      %s242 = sphi 0, %s242
      %s244 = sphi 0, %s242
      %s245 = sphi 0, %s244
      %s259 = sphi 0, %s245
      %s263 = sphi 0, %s263
      %s265 = sphi 0, %s263
      %s266 = sphi 0, %s265
      %s280 = sphi 0, %s266
      %s284 = sphi 0, %s284
      %s286 = sphi 0, %s284
      %s287 = sphi 0, %s286
      %s301 = sphi 0, %s287
      %s305 = sphi 0, %s305
      %s307 = sphi 0, %s305
      %s308 = sphi 0, %s307
      %s322 = sphi 0, %s308
      %s326 = sphi 0, %s326
      %s328 = sphi 0, %s326
      %s329 = sphi 0, %s328
      %s343 = sphi 0, %s329
      %s347 = sphi 0, %s347
      %s349 = sphi 0, %s347
      %s350 = sphi 0, %s349
      %s364 = sphi 0, %s350
    $region4: #{dgcnn_forward.1} parent=1 // loop_header_branch
      %32 = sbr.rel (%p30) target = $region8
    $region5: #{dgcnn_forward.1} parent=1 // loop_body
      %s34 = ssub.s32 %s29, 1
      %s35 = ssub.s32 %s29, 2
      %s42 = sadd.s32 1, %s37
      %p43 = scmp.ge.s32.totalorder %s42, 2
      %s44 = scalar_select %p43, 0, %s42
      %s45 = sadd.s32 1, %s36
      %s46 = scalar_select %p43, %s45, %s36
      %p47 = scmp.ge.s32.totalorder %s46, 4
      %s48 = scalar_select %p47, 0, %s46
      %s49 = ssub.s32 %s37, %s44
      %p50 = scmp.eq.s32.totalorder %s49, 0
      %s52 = sadd.s32 %s51, 1
      %s53 = scalar_select %p50, %s51, %s52
      %p56 = pneg %p50
      %p57 = scmp.eq.s32.totalorder %s29, 7
      %p58 = por %p56, %p57
      %p59 = scmp.ne.s32.totalorder %s51, %s54
      %p60 = scmp.eq.s32.totalorder %s29, 0
      %p61 = por %p59, %p60
      %p62 = scmp.ne.s32.totalorder %s51, %s54
      %p63 = scmp.eq.s32.totalorder %s34, 7
      %p64 = por %p62, %p63
      %p65 = scmp.ne.s32.totalorder %s54, %s55
      %p66 = scmp.eq.s32.totalorder %s34, 0
      %p67 = por %p65, %p66
      %p68 = scmp.ne.s32.totalorder %s54, %s55
      %p69 = scmp.eq.s32.totalorder %s35, 7
      %p70 = por %p68, %p69
      %p72 = scmp.ne.s32.totalorder %s55, %s71
      %p73 = scmp.eq.s32.totalorder %s35, 0
      %p74 = por %p72, %p73
      %s76 = sadd.s32 %s75, 1
      %p79 = scmp.eq.s32.totalorder %s29, 7
      %p80 = scmp.ne.s32.totalorder %s75, %s77
      %p81 = scmp.eq.s32.totalorder %s29, 0
      %p82 = por %p80, %p81
      %p83 = scmp.ne.s32.totalorder %s75, %s77
      %p84 = scmp.eq.s32.totalorder %s34, 7
      %p85 = por %p83, %p84
      %p86 = scmp.ne.s32.totalorder %s77, %s78
      %p87 = scmp.eq.s32.totalorder %s34, 0
      %p88 = por %p86, %p87
      %p89 = scmp.ne.s32.totalorder %s77, %s78
      %p90 = scmp.eq.s32.totalorder %s35, 7
      %p91 = por %p89, %p90
      %p93 = scmp.ne.s32.totalorder %s78, %s92
      %p94 = scmp.eq.s32.totalorder %s35, 0
      %p95 = por %p93, %p94
      %s97 = sadd.s32 %s96, 1
      %p100 = scmp.eq.s32.totalorder %s29, 7
      %p101 = scmp.ne.s32.totalorder %s96, %s98
      %p102 = scmp.eq.s32.totalorder %s29, 0
      %p103 = por %p101, %p102
      %p104 = scmp.ne.s32.totalorder %s96, %s98
      %p105 = scmp.eq.s32.totalorder %s34, 7
      %p106 = por %p104, %p105
      %p107 = scmp.ne.s32.totalorder %s98, %s99
      %p108 = scmp.eq.s32.totalorder %s34, 0
      %p109 = por %p107, %p108
      %p110 = scmp.ne.s32.totalorder %s98, %s99
      %p111 = scmp.eq.s32.totalorder %s35, 7
      %p112 = por %p110, %p111
      %p114 = scmp.ne.s32.totalorder %s99, %s113
      %p115 = scmp.eq.s32.totalorder %s35, 0
      %p116 = por %p114, %p115
      %s117 = ssub.s32 %s36, %s48
      %p118 = scmp.eq.s32.totalorder %s117, 0
      %s120 = sadd.s32 %s119, 1
      %s121 = scalar_select %p118, %s119, %s120
      %p124 = pneg %p118
      %p125 = scmp.eq.s32.totalorder %s29, 7
      %p126 = por %p124, %p125
      %p127 = scmp.ne.s32.totalorder %s119, %s122
      %p128 = scmp.eq.s32.totalorder %s29, 0
      %p129 = por %p127, %p128
      %p130 = scmp.ne.s32.totalorder %s119, %s122
      %p131 = scmp.eq.s32.totalorder %s34, 7
      %p132 = por %p130, %p131
      %p133 = scmp.ne.s32.totalorder %s122, %s123
      %p134 = scmp.eq.s32.totalorder %s34, 0
      %p135 = por %p133, %p134
      %p136 = scmp.ne.s32.totalorder %s122, %s123
      %p137 = scmp.eq.s32.totalorder %s35, 7
      %p138 = por %p136, %p137
      %p140 = scmp.ne.s32.totalorder %s123, %s139
      %p141 = scmp.eq.s32.totalorder %s35, 0
      %p142 = por %p140, %p141
      %s143 = ssub.s32 %s36, %s48
      %p144 = scmp.eq.s32.totalorder %s143, 0
      %s146 = sadd.s32 %s145, 1
      %s147 = scalar_select %p144, %s145, %s146
      %p150 = pneg %p144
      %p151 = scmp.eq.s32.totalorder %s29, 7
      %p152 = por %p150, %p151
      %p153 = scmp.ne.s32.totalorder %s145, %s148
      %p154 = scmp.eq.s32.totalorder %s29, 0
      %p155 = por %p153, %p154
      %p156 = scmp.ne.s32.totalorder %s145, %s148
      %p157 = scmp.eq.s32.totalorder %s34, 7
      %p158 = por %p156, %p157
      %p159 = scmp.ne.s32.totalorder %s148, %s149
      %p160 = scmp.eq.s32.totalorder %s34, 0
      %p161 = por %p159, %p160
      %p162 = scmp.ne.s32.totalorder %s148, %s149
      %p163 = scmp.eq.s32.totalorder %s35, 7
      %p164 = por %p162, %p163
      %p166 = scmp.ne.s32.totalorder %s149, %s165
      %p167 = scmp.eq.s32.totalorder %s35, 0
      %p168 = por %p166, %p167
      %s169 = ssub.s32 %s36, %s48
      %p170 = scmp.eq.s32.totalorder %s169, 0
      %s172 = sadd.s32 %s171, 1
      %s173 = scalar_select %p170, %s171, %s172
      %p176 = pneg %p170
      %p177 = scmp.eq.s32.totalorder %s29, 7
      %p178 = por %p176, %p177
      %p179 = scmp.ne.s32.totalorder %s171, %s174
      %p180 = scmp.eq.s32.totalorder %s29, 0
      %p181 = por %p179, %p180
      %p182 = scmp.ne.s32.totalorder %s171, %s174
      %p183 = scmp.eq.s32.totalorder %s34, 7
      %p184 = por %p182, %p183
      %p185 = scmp.ne.s32.totalorder %s174, %s175
      %p186 = scmp.eq.s32.totalorder %s34, 0
      %p187 = por %p185, %p186
      %p188 = scmp.ne.s32.totalorder %s174, %s175
      %p189 = scmp.eq.s32.totalorder %s35, 7
      %p190 = por %p188, %p189
      %p192 = scmp.ne.s32.totalorder %s175, %s191
      %p193 = scmp.eq.s32.totalorder %s35, 0
      %p194 = por %p192, %p193
      %s195 = ssub.s32 %s36, %s48
      %p196 = scmp.eq.s32.totalorder %s195, 0
      %s198 = sadd.s32 %s197, 1
      %s199 = scalar_select %p196, %s197, %s198
      %p202 = pneg %p196
      %p203 = scmp.eq.s32.totalorder %s29, 7
      %p204 = por %p202, %p203
      %p205 = scmp.ne.s32.totalorder %s197, %s200
      %p206 = scmp.eq.s32.totalorder %s29, 0
      %p207 = por %p205, %p206
      %p208 = scmp.ne.s32.totalorder %s197, %s200
      %p209 = scmp.eq.s32.totalorder %s34, 7
      %p210 = por %p208, %p209
      %p211 = scmp.ne.s32.totalorder %s200, %s201
      %p212 = scmp.eq.s32.totalorder %s34, 0
      %p213 = por %p211, %p212
      %p214 = scmp.ne.s32.totalorder %s200, %s201
      %p215 = scmp.eq.s32.totalorder %s35, 7
      %p216 = por %p214, %p215
      %p218 = scmp.ne.s32.totalorder %s201, %s217
      %p219 = scmp.eq.s32.totalorder %s35, 0
      %p220 = por %p218, %p219
      %s222 = sadd.s32 %s221, 1
      %p225 = scmp.eq.s32.totalorder %s29, 7
      %p226 = scmp.ne.s32.totalorder %s221, %s223
      %p227 = scmp.eq.s32.totalorder %s29, 0
      %p228 = por %p226, %p227
      %p229 = scmp.ne.s32.totalorder %s221, %s223
      %p230 = scmp.eq.s32.totalorder %s34, 7
      %p231 = por %p229, %p230
      %p232 = scmp.ne.s32.totalorder %s223, %s224
      %p233 = scmp.eq.s32.totalorder %s34, 0
      %p234 = por %p232, %p233
      %p235 = scmp.ne.s32.totalorder %s223, %s224
      %p236 = scmp.eq.s32.totalorder %s35, 7
      %p237 = por %p235, %p236
      %p239 = scmp.ne.s32.totalorder %s224, %s238
      %p240 = scmp.eq.s32.totalorder %s35, 0
      %p241 = por %p239, %p240
      %s243 = sadd.s32 %s242, 1
      %p246 = scmp.eq.s32.totalorder %s29, 7
      %p247 = scmp.ne.s32.totalorder %s242, %s244
      %p248 = scmp.eq.s32.totalorder %s29, 0
      %p249 = por %p247, %p248
      %p250 = scmp.ne.s32.totalorder %s242, %s244
      %p251 = scmp.eq.s32.totalorder %s34, 7
      %p252 = por %p250, %p251
      %p253 = scmp.ne.s32.totalorder %s244, %s245
      %p254 = scmp.eq.s32.totalorder %s34, 0
      %p255 = por %p253, %p254
      %p256 = scmp.ne.s32.totalorder %s244, %s245
      %p257 = scmp.eq.s32.totalorder %s35, 7
      %p258 = por %p256, %p257
      %p260 = scmp.ne.s32.totalorder %s245, %s259
      %p261 = scmp.eq.s32.totalorder %s35, 0
      %p262 = por %p260, %p261
      %s264 = sadd.s32 %s263, 1
      %p267 = scmp.eq.s32.totalorder %s29, 7
      %p268 = scmp.ne.s32.totalorder %s263, %s265
      %p269 = scmp.eq.s32.totalorder %s29, 0
      %p270 = por %p268, %p269
      %p271 = scmp.ne.s32.totalorder %s263, %s265
      %p272 = scmp.eq.s32.totalorder %s34, 7
      %p273 = por %p271, %p272
      %p274 = scmp.ne.s32.totalorder %s265, %s266
      %p275 = scmp.eq.s32.totalorder %s34, 0
      %p276 = por %p274, %p275
      %p277 = scmp.ne.s32.totalorder %s265, %s266
      %p278 = scmp.eq.s32.totalorder %s35, 7
      %p279 = por %p277, %p278
      %p281 = scmp.ne.s32.totalorder %s266, %s280
      %p282 = scmp.eq.s32.totalorder %s35, 0
      %p283 = por %p281, %p282
      %s285 = sadd.s32 %s284, 1
      %p288 = scmp.eq.s32.totalorder %s29, 7
      %p289 = scmp.ne.s32.totalorder %s284, %s286
      %p290 = scmp.eq.s32.totalorder %s29, 0
      %p291 = por %p289, %p290
      %p292 = scmp.ne.s32.totalorder %s284, %s286
      %p293 = scmp.eq.s32.totalorder %s34, 7
      %p294 = por %p292, %p293
      %p295 = scmp.ne.s32.totalorder %s286, %s287
      %p296 = scmp.eq.s32.totalorder %s34, 0
      %p297 = por %p295, %p296
      %p298 = scmp.ne.s32.totalorder %s286, %s287
      %p299 = scmp.eq.s32.totalorder %s35, 7
      %p300 = por %p298, %p299
      %p302 = scmp.ne.s32.totalorder %s287, %s301
      %p303 = scmp.eq.s32.totalorder %s35, 0
      %p304 = por %p302, %p303
      %s306 = sadd.s32 %s305, 1
      %p309 = scmp.eq.s32.totalorder %s29, 7
      %p310 = scmp.ne.s32.totalorder %s305, %s307
      %p311 = scmp.eq.s32.totalorder %s29, 0
      %p312 = por %p310, %p311
      %p313 = scmp.ne.s32.totalorder %s305, %s307
      %p314 = scmp.eq.s32.totalorder %s34, 7
      %p315 = por %p313, %p314
      %p316 = scmp.ne.s32.totalorder %s307, %s308
      %p317 = scmp.eq.s32.totalorder %s34, 0
      %p318 = por %p316, %p317
      %p319 = scmp.ne.s32.totalorder %s307, %s308
      %p320 = scmp.eq.s32.totalorder %s35, 7
      %p321 = por %p319, %p320
      %p323 = scmp.ne.s32.totalorder %s308, %s322
      %p324 = scmp.eq.s32.totalorder %s35, 0
      %p325 = por %p323, %p324
      %s327 = sadd.s32 %s326, 1
      %p330 = scmp.eq.s32.totalorder %s29, 7
      %p331 = scmp.ne.s32.totalorder %s326, %s328
      %p332 = scmp.eq.s32.totalorder %s29, 0
      %p333 = por %p331, %p332
      %p334 = scmp.ne.s32.totalorder %s326, %s328
      %p335 = scmp.eq.s32.totalorder %s34, 7
      %p336 = por %p334, %p335
      %p337 = scmp.ne.s32.totalorder %s328, %s329
      %p338 = scmp.eq.s32.totalorder %s34, 0
      %p339 = por %p337, %p338
      %p340 = scmp.ne.s32.totalorder %s328, %s329
      %p341 = scmp.eq.s32.totalorder %s35, 7
      %p342 = por %p340, %p341
      %p344 = scmp.ne.s32.totalorder %s329, %s343
      %p345 = scmp.eq.s32.totalorder %s35, 0
      %p346 = por %p344, %p345
      %s348 = sadd.s32 %s347, 1
      %p351 = scmp.eq.s32.totalorder %s29, 7
      %p352 = scmp.ne.s32.totalorder %s347, %s349
      %p353 = scmp.eq.s32.totalorder %s29, 0
      %p354 = por %p352, %p353
      %p355 = scmp.ne.s32.totalorder %s347, %s349
      %p356 = scmp.eq.s32.totalorder %s34, 7
      %p357 = por %p355, %p356
      %p358 = scmp.ne.s32.totalorder %s349, %s350
      %p359 = scmp.eq.s32.totalorder %s34, 0
      %p360 = por %p358, %p359
      %p361 = scmp.ne.s32.totalorder %s349, %s350
      %p362 = scmp.eq.s32.totalorder %s35, 7
      %p363 = por %p361, %p362
      %p365 = scmp.ne.s32.totalorder %s350, %s364
      %p366 = scmp.eq.s32.totalorder %s35, 0
      %p367 = por %p365, %p366
      %p368 = scmp.le.s32.totalorder 1, %s29
      %p369 = scmp.lt.s32.totalorder %s29, 9
      %p370 = pnand %p368, %p369
      %p371 = pneg %p370
      // Predicated region
      $region9: #{dgcnn_forward.1} parent=5 // pred_check
        _
      $region10: #{dgcnn_forward.1} parent=5 // pred_check_branch
        %373 = sbr.rel (%p370) target = $region12
      $region11: #{dgcnn_forward.1} parent=5 // pred_region
        %s374 = ssub.s32 %s29, 1
        // Predicated region
        $region13: #{dgcnn_forward.1} parent=11 // pred_check
          %p375 = pneg %p88
        $region14: #{dgcnn_forward.1} parent=11 // pred_check_branch
          %377 = sbr.rel (%p375) target = $region16
        $region15: #{dgcnn_forward.1} parent=11 // pred_region
          _
        $region16: #{dgcnn_forward.1} parent=11 // pred_fallthru
          _
        // Predicated region
        $region17: #{dgcnn_forward.1} parent=11 // pred_check
          %p378 = pneg %p109
        $region18: #{dgcnn_forward.1} parent=11 // pred_check_branch
          %380 = sbr.rel (%p378) target = $region20
        $region19: #{dgcnn_forward.1} parent=11 // pred_region
          _
        $region20: #{dgcnn_forward.1} parent=11 // pred_fallthru
          _
        // Predicated region
        $region21: #{dgcnn_forward.1} parent=11 // pred_check
          %p381 = pneg %p234
        $region22: #{dgcnn_forward.1} parent=11 // pred_check_branch
          %383 = sbr.rel (%p381) target = $region24
        $region23: #{dgcnn_forward.1} parent=11 // pred_region
          %s385 = ssub.s32 10240, 10240
          %386 = vsyncadd [#allocation13], %s385
          %s387 = sshll.u32 [#allocation14], 4
          %s388 = int_to_ptr.vmem [resolvable:$true] %s387
          %393 = dma.hbm_to_vmem [thread:$0]  %s7, 10240, %s388, [#allocation13], 128, 128, 8
        $region24: #{dgcnn_forward.1} parent=11 // pred_fallthru
          _
        // Predicated region
        $region25: #{dgcnn_forward.1} parent=11 // pred_check
          %p394 = pneg %p255
        $region26: #{dgcnn_forward.1} parent=11 // pred_check_branch
          %396 = sbr.rel (%p394) target = $region28
        $region27: #{dgcnn_forward.1} parent=11 // pred_region
          _
        $region28: #{dgcnn_forward.1} parent=11 // pred_fallthru
          _
        // Predicated region
        $region29: #{dgcnn_forward.1} parent=11 // pred_check
          %p397 = pneg %p276
        $region30: #{dgcnn_forward.1} parent=11 // pred_check_branch
          %399 = sbr.rel (%p397) target = $region32
        $region31: #{dgcnn_forward.1} parent=11 // pred_region
          _
        $region32: #{dgcnn_forward.1} parent=11 // pred_fallthru
          _
        // Predicated region
        $region33: #{dgcnn_forward.1} parent=11 // pred_check
          %p400 = pneg %p297
        $region34: #{dgcnn_forward.1} parent=11 // pred_check_branch
          %402 = sbr.rel (%p400) target = $region36
        $region35: #{dgcnn_forward.1} parent=11 // pred_region
          %s404 = ssub.s32 16, 16
          %405 = vsyncadd [#allocation16], %s404
          %s407 = sshll.u32 [#allocation15], 4
          %s408 = int_to_ptr.vmem [resolvable:$true] %s407
          %410 = dma.hbm_to_vmem [thread:$0]  %s10, 16, %s408, [#allocation16]
        $region36: #{dgcnn_forward.1} parent=11 // pred_fallthru
          _
        // Predicated region
        $region37: #{dgcnn_forward.1} parent=11 // pred_check
          %p411 = pneg %p318
        $region38: #{dgcnn_forward.1} parent=11 // pred_check_branch
          %413 = sbr.rel (%p411) target = $region40
        $region39: #{dgcnn_forward.1} parent=11 // pred_region
          _
        $region40: #{dgcnn_forward.1} parent=11 // pred_fallthru
          _
        // Predicated region
        $region41: #{dgcnn_forward.1} parent=11 // pred_check
          %p414 = pneg %p339
        $region42: #{dgcnn_forward.1} parent=11 // pred_check_branch
          %416 = sbr.rel (%p414) target = $region44
        $region43: #{dgcnn_forward.1} parent=11 // pred_region
          %s418 = ssub.s32 16, 16
          %419 = vsyncadd [#allocation16], %s418
          %s421 = sshll.u32 [#allocation17], 4
          %s422 = int_to_ptr.vmem [resolvable:$true] %s421
          %424 = dma.hbm_to_vmem [thread:$0]  %s12, 16, %s422, [#allocation16]
        $region44: #{dgcnn_forward.1} parent=11 // pred_fallthru
          _
      $region12: #{dgcnn_forward.1} parent=5 // pred_fallthru
        _
      %p425 = scmp.lt.s32.totalorder %s29, 8
      // Predicated region
      $region45: #{dgcnn_forward.1} parent=5 // pred_check
        %p426 = pneg %p425
      $region46: #{dgcnn_forward.1} parent=5 // pred_check_branch
        %428 = sbr.rel (%p426) target = $region48
      $region47: #{dgcnn_forward.1} parent=5 // pred_region
        // Predicated region
        $region49: #{dgcnn_forward.1} parent=47 // pred_check
          %p429 = pneg %p61
        $region50: #{dgcnn_forward.1} parent=47 // pred_check_branch
          %431 = sbr.rel (%p429) target = $region52
        $region51: #{dgcnn_forward.1} parent=47 // pred_region
          %s432 = smul.u32 4, %s37
          %p433 = scmp.lt.s32.totalorder %s432, 7
          %s434 = scalar_select %p433, %s432, 7
          %s435 = smul.addr %s434, 4
          %s436 = scalar_lea.vmem %s0, %s435
          %s437 = smul.u32 4, %s37
        $region52: #{dgcnn_forward.1} parent=47 // pred_fallthru
          _
        // Predicated region
        $region53: #{dgcnn_forward.1} parent=47 // pred_check
          %p438 = pneg %p129
        $region54: #{dgcnn_forward.1} parent=47 // pred_check_branch
          %440 = sbr.rel (%p438) target = $region56
        $region55: #{dgcnn_forward.1} parent=47 // pred_region
          %s441 = sand.u32 %s119, 1
          %s442 = scalar_lea.sflag [#allocation8], %s441
          %s443 = sand.u32 %s119, 1
          %s444 = smul.addr %s443, 128
          %s445 = scalar_lea.vmem [#allocation7], %s444
          %s447 = ssub.s32 2048, 2048
          %448 = vsyncadd %s442, %s447
          %s449 = smul.addr %s36, 16
          %s450 = smul.addr %s449, 128
          %s451 = scalar_lea.hbm %s3, %s450
          %s452 = sshll.u32 %s445, 4
          %s453 = int_to_ptr.vmem [resolvable:$true] %s452
          %458 = dma.hbm_to_vmem [thread:$0]  %s451, 2048, %s453, %s442, 128, 128, 8
        $region56: #{dgcnn_forward.1} parent=47 // pred_fallthru
          _
        // Predicated region
        $region57: #{dgcnn_forward.1} parent=47 // pred_check
          %p459 = pneg %p155
        $region58: #{dgcnn_forward.1} parent=47 // pred_check_branch
          %461 = sbr.rel (%p459) target = $region60
        $region59: #{dgcnn_forward.1} parent=47 // pred_region
          %s462 = sand.u32 %s29, 1
          %s463 = scalar_lea.sflag [#allocation10], %s462
          %s464 = sand.u32 %s145, 1
          %s465 = scalar_lea.vmem [#allocation9], %s464
          %s467 = ssub.s32 16, 16
          %468 = vsyncadd %s463, %s467
          %s469 = smul.addr %s36, 16
          %s470 = scalar_lea.hbm %s4, %s469
          %s472 = sshll.u32 %s465, 4
          %s473 = int_to_ptr.vmem [resolvable:$true] %s472
          %475 = dma.hbm_to_vmem [thread:$0]  %s470, 16, %s473, %s463
        $region60: #{dgcnn_forward.1} parent=47 // pred_fallthru
          _
        // Predicated region
        $region61: #{dgcnn_forward.1} parent=47 // pred_check
          %p476 = pneg %p181
        $region62: #{dgcnn_forward.1} parent=47 // pred_check_branch
          %478 = sbr.rel (%p476) target = $region64
        $region63: #{dgcnn_forward.1} parent=47 // pred_region
          %s479 = sand.u32 %s29, 1
          %s480 = scalar_lea.sflag [#allocation10], %s479
          %s481 = sand.u32 %s171, 1
          %s482 = scalar_lea.vmem [#allocation11], %s481
          %s484 = ssub.s32 16, 16
          %485 = vsyncadd %s480, %s484
          %s486 = smul.addr %s36, 16
          %s487 = scalar_lea.hbm %s5, %s486
          %s489 = sshll.u32 %s482, 4
          %s490 = int_to_ptr.vmem [resolvable:$true] %s489
          %492 = dma.hbm_to_vmem [thread:$0]  %s487, 16, %s490, %s480
        $region64: #{dgcnn_forward.1} parent=47 // pred_fallthru
          _
        // Predicated region
        $region65: #{dgcnn_forward.1} parent=47 // pred_check
          %p493 = pneg %p207
        $region66: #{dgcnn_forward.1} parent=47 // pred_check_branch
          %495 = sbr.rel (%p493) target = $region68
        $region67: #{dgcnn_forward.1} parent=47 // pred_region
          %s496 = sand.u32 %s29, 1
          %s497 = scalar_lea.sflag [#allocation13], %s496
          %s498 = sand.u32 %s197, 1
          %s499 = scalar_lea.vmem [#allocation12], %s498
          %s501 = ssub.s32 16, 16
          %502 = vsyncadd %s497, %s501
          %s503 = smul.addr %s36, 16
          %s504 = scalar_lea.hbm %s6, %s503
          %s506 = sshll.u32 %s499, 4
          %s507 = int_to_ptr.vmem [resolvable:$true] %s506
          %509 = dma.hbm_to_vmem [thread:$0]  %s504, 16, %s507, %s497
        $region68: #{dgcnn_forward.1} parent=47 // pred_fallthru
          _
      $region48: #{dgcnn_forward.1} parent=5 // pred_fallthru
        _
      %p510 = scmp.le.s32.totalorder 1, %s29
      %p511 = scmp.lt.s32.totalorder %s29, 9
      %p512 = pnand %p510, %p511
      %p513 = pneg %p512
      // Predicated region
      $region69: #{dgcnn_forward.1} parent=5 // pred_check
        _
      $region70: #{dgcnn_forward.1} parent=5 // pred_check_branch
        %515 = sbr.rel (%p512) target = $region72
      $region71: #{dgcnn_forward.1} parent=5 // pred_region
        %s516 = ssub.s32 %s29, 1
        %s517 = sand.u32 %s122, 1
        %s518 = scalar_lea.sflag [#allocation8], %s517
        %s519 = sand.u32 %s122, 1
        %s520 = smul.addr %s519, 128
        %s521 = scalar_lea.vmem [#allocation7], %s520
        // Predicated region
        $region73: #{dgcnn_forward.1} parent=71 // pred_check
          %p522 = pneg %p135
        $region74: #{dgcnn_forward.1} parent=71 // pred_check_branch
          %524 = sbr.rel (%p522) target = $region76
        $region75: #{dgcnn_forward.1} parent=71 // pred_region
          %525 = dma.done %s518, 2048
        $region76: #{dgcnn_forward.1} parent=71 // pred_fallthru
          _
        %s526 = sand.u32 %s34, 1
        %s527 = scalar_lea.sflag [#allocation10], %s526
        %s528 = sand.u32 %s148, 1
        %s529 = scalar_lea.vmem [#allocation9], %s528
        // Predicated region
        $region77: #{dgcnn_forward.1} parent=71 // pred_check
          %p530 = pneg %p161
        $region78: #{dgcnn_forward.1} parent=71 // pred_check_branch
          %532 = sbr.rel (%p530) target = $region80
        $region79: #{dgcnn_forward.1} parent=71 // pred_region
          %533 = dma.done %s527, 16
        $region80: #{dgcnn_forward.1} parent=71 // pred_fallthru
          _
        %s534 = sand.u32 %s34, 1
        %s535 = scalar_lea.sflag [#allocation10], %s534
        %s536 = sand.u32 %s174, 1
        %s537 = scalar_lea.vmem [#allocation11], %s536
        // Predicated region
        $region81: #{dgcnn_forward.1} parent=71 // pred_check
          %p538 = pneg %p187
        $region82: #{dgcnn_forward.1} parent=71 // pred_check_branch
          %540 = sbr.rel (%p538) target = $region84
        $region83: #{dgcnn_forward.1} parent=71 // pred_region
          %541 = dma.done %s535, 16
        $region84: #{dgcnn_forward.1} parent=71 // pred_fallthru
          _
        %s542 = sand.u32 %s34, 1
        %s543 = scalar_lea.sflag [#allocation13], %s542
        %s544 = sand.u32 %s200, 1
        %s545 = scalar_lea.vmem [#allocation12], %s544
        // Predicated region
        $region85: #{dgcnn_forward.1} parent=71 // pred_check
          %p546 = pneg %p213
        $region86: #{dgcnn_forward.1} parent=71 // pred_check_branch
          %548 = sbr.rel (%p546) target = $region88
        $region87: #{dgcnn_forward.1} parent=71 // pred_region
          %549 = dma.done %s543, 16
        $region88: #{dgcnn_forward.1} parent=71 // pred_fallthru
          _
        // Predicated region
        $region89: #{dgcnn_forward.1} parent=71 // pred_check
          %p550 = pneg %p234
        $region90: #{dgcnn_forward.1} parent=71 // pred_check_branch
          %552 = sbr.rel (%p550) target = $region92
        $region91: #{dgcnn_forward.1} parent=71 // pred_region
          %553 = dma.done [#allocation13], 10240
        $region92: #{dgcnn_forward.1} parent=71 // pred_fallthru
          _
        // Predicated region
        $region93: #{dgcnn_forward.1} parent=71 // pred_check
          %p554 = pneg %p297
        $region94: #{dgcnn_forward.1} parent=71 // pred_check_branch
          %556 = sbr.rel (%p554) target = $region96
        $region95: #{dgcnn_forward.1} parent=71 // pred_region
          %557 = dma.done [#allocation16], 16
        $region96: #{dgcnn_forward.1} parent=71 // pred_fallthru
          _
        // Predicated region
        $region97: #{dgcnn_forward.1} parent=71 // pred_check
          %p558 = pneg %p339
        $region98: #{dgcnn_forward.1} parent=71 // pred_check_branch
          %560 = sbr.rel (%p558) target = $region100
        $region99: #{dgcnn_forward.1} parent=71 // pred_region
          %561 = dma.done [#allocation16], 16
        $region100: #{dgcnn_forward.1} parent=71 // pred_fallthru
          _
        %s562 = smul.u32 4, %s39
        %p563 = scmp.lt.s32.totalorder %s562, 7
        %s564 = scalar_select %p563, %s562, 7
        %s565 = smul.addr %s564, 4
        %s566 = scalar_lea.vmem %s0, %s565
        %p567 = pneg %p67
        %p568 = pneg %p64
        %p569 = pneg %p88
        %p570 = pneg %p85
        %p571 = pneg %p109
        %p572 = pneg %p106
        %s573 = sand.u32 %s122, 1
        %s574 = scalar_lea.sflag [#allocation8], %s573
        %s575 = sand.u32 %s122, 1
        %s576 = smul.addr %s575, 128
        %s577 = scalar_lea.vmem [#allocation7], %s576
        %p578 = pneg %p135
        %p579 = pneg %p132
        %s580 = sand.u32 %s34, 1
        %s581 = scalar_lea.sflag [#allocation10], %s580
        %s582 = sand.u32 %s148, 1
        %s583 = scalar_lea.vmem [#allocation9], %s582
        %p584 = pneg %p161
        %p585 = pneg %p158
        %s586 = sand.u32 %s34, 1
        %s587 = scalar_lea.sflag [#allocation10], %s586
        %s588 = sand.u32 %s174, 1
        %s589 = scalar_lea.vmem [#allocation11], %s588
        %p590 = pneg %p187
        %p591 = pneg %p184
        %s592 = sand.u32 %s34, 1
        %s593 = scalar_lea.sflag [#allocation13], %s592
        %s594 = sand.u32 %s200, 1
        %s595 = scalar_lea.vmem [#allocation12], %s594
        %p596 = pneg %p213
        %p597 = pneg %p210
        %p598 = pneg %p234
        %p599 = pneg %p231
        %p600 = pneg %p255
        %p601 = pneg %p252
        %p602 = pneg %p276
        %p603 = pneg %p273
        %p604 = pneg %p297
        %p605 = pneg %p294
        %p606 = pneg %p318
        %p607 = pneg %p315
        %p608 = pneg %p339
        %p609 = pneg %p336
        %p610 = pneg %p360
        %p611 = pneg %p357
        %s612 = smul.u32 4, %s39
        %p613 = scmp.lt.s32.totalorder %s612, 7
        %s614 = scalar_select %p613, %s612, 7
        %s615 = smul.addr %s614, 4
        %s616 = scalar_lea.vmem %s0, %s615
        %s617 = smul.u32 4, %s39
        %p619 = scmp.eq.s32.totalorder %s39, 0
        // Predicated region
        $region101: #{dgcnn_forward.1} parent=71 // pred_check
          %p620 = pneg %p619
        $region102: #{dgcnn_forward.1} parent=71 // pred_check_branch
          %622 = sbr.rel (%p620) target = $region104
        $region103: #{dgcnn_forward.1} parent=71 // pred_region
          %623 = vst [vmem:[#allocation4] sm:$0x1] 0.0
          %624 = vst [vmem:[#allocation5] sm:$0x1] 0.0
        $region104: #{dgcnn_forward.1} parent=71 // pred_fallthru
          _
        %p625 = scmp.eq.s32.totalorder %s38, 0
        %p626 = pnand %p625, %p619
        %p627 = pneg %p626
        // Predicated region
        $region105: #{dgcnn_forward.1} parent=71 // pred_check
          _
        $region106: #{dgcnn_forward.1} parent=71 // pred_check_branch
          %629 = sbr.rel (%p626) target = $region108
        $region107: #{dgcnn_forward.1} parent=71 // pred_region
          %v630 = vld [vmem:[%s1] sm:$0xf]
          %v631 = vld [vmem:[%s1 + $0x4] sm:$0xf]
          %v632 = vld [vmem:[%s1 + $0x8] sm:$0xf]
          %v633 = vld [vmem:[%s1 + $0xc] sm:$0xf]
          %v634 = vld [vmem:[%s1 + $0x10] sm:$0xf]
          %v635 = vld [vmem:[%s1 + $0x14] sm:$0xf]
          %v636 = vld [vmem:[%s1 + $0x18] sm:$0xf]
          %v637 = vld [vmem:[%s1 + $0x1c] sm:$0xf]
          %v646 = vunpack.c.l.b16 %v630
          %v647 = vunpack.c.l.b16 %v631
          %v648 = vunpack.c.l.b16 %v632
          %v649 = vunpack.c.l.b16 %v633
          %v650 = vunpack.c.l.b16 %v634
          %v651 = vunpack.c.l.b16 %v635
          %v652 = vunpack.c.l.b16 %v636
          %v653 = vunpack.c.l.b16 %v637
          %v654 = vpack.c.b16 %v647, %v646
          %v655 = vpack.c.b16 %v649, %v648
          %v656 = vpack.c.b16 %v651, %v650
          %v657 = vpack.c.b16 %v653, %v652
          %662 = vst [vmem:[#allocation2] sm:$0xff] %v654
          %663 = vst [vmem:[#allocation2 + $0x8] sm:$0xff] %v655
          %664 = vst [vmem:[#allocation2 + $0x10] sm:$0xff] %v656
          %665 = vst [vmem:[#allocation2 + $0x18] sm:$0xff] %v657
          %666 = vst [vmem:[#allocation6] sm:$0xff] 0.0
          %667 = vst [vmem:[#allocation6 + $0x8] sm:$0xff] 0.0
          %668 = vst [vmem:[#allocation6 + $0x10] sm:$0xff] 0.0
          %669 = vst [vmem:[#allocation6 + $0x18] sm:$0xff] 0.0
          %670 = vst [vmem:[#allocation6 + $0x20] sm:$0xff] 0.0
          %v671 = vld [vmem:[%s2] sm:$0xf]
          %v672 = vld [vmem:[%s1] sm:$0xf]
          %v673 = vld [vmem:[%s1 + $0x4] sm:$0xf]
          %v674 = vld [vmem:[%s1 + $0x8] sm:$0xf]
          %v675 = vld [vmem:[%s1 + $0xc] sm:$0xf]
          %v676 = vld [vmem:[%s1 + $0x10] sm:$0xf]
          %v677 = vld [vmem:[%s1 + $0x14] sm:$0xf]
          %v678 = vld [vmem:[%s1 + $0x18] sm:$0xf]
          %v679 = vld [vmem:[%s1 + $0x1c] sm:$0xf]
          %v688 = vunpack.c.l.b16 %v672
          %v689 = vunpack.c.l.b16 %v673
          %v690 = vunpack.c.l.b16 %v674
          %v691 = vunpack.c.l.b16 %v675
          %v692 = vunpack.c.l.b16 %v676
          %v693 = vunpack.c.l.b16 %v677
          %v694 = vunpack.c.l.b16 %v678
          %v695 = vunpack.c.l.b16 %v679
          %v696 = vpack.c.b16 %v689, %v688
          %v697 = vpack.c.b16 %v691, %v690
          %v698 = vpack.c.b16 %v693, %v692
          %v699 = vpack.c.b16 %v695, %v694
          %vm704 = vcmask 523264
          %v706 = vsel %vm704, %v671, 0
          %708 = vmatprep.subr.bf16.mxu0 0
          %709 = vmatpush1.bf16.msra.mxu0 %v696
          %710 = vmatprep.subr.bf16.mxu0 0
          %711 = vmatpush1.bf16.msra.mxu0 %v697
          %712 = vmatprep.subr.bf16.mxu0 0
          %713 = vmatpush1.bf16.msra.mxu0 %v698
          %714 = vmatprep.subr.bf16.mxu0 0
          %715 = vmatpush1.bf16.msra.mxu0 %v699
          %716 = vmatprep.subr.bf16.mxu0 0
          %717 = vmatpush1.bf16.msra.mxu0 0
          %718 = vmatprep.subr.bf16.mxu0 0
          %719 = vmatpush1.bf16.msra.mxu0 0
          %720 = vmatprep.subr.bf16.mxu0 0
          %721 = vmatpush1.bf16.msra.mxu0 0
          %722 = vmatprep.subr.bf16.mxu0 0
          %723 = vmatpush1.bf16.msra.mxu0 0
          %724 = vmatprep.subr.bf16.mxu0 0
          %725 = vmatpush1.bf16.msra.mxu0 0
          %726 = vmatprep.subr.bf16.mxu0 0
          %727 = vmatpush1.bf16.msra.mxu0 0
          %728 = vmatprep.subr.bf16.mxu0 0
          %729 = vmatpush1.bf16.msra.mxu0 0
          %730 = vmatprep.subr.bf16.mxu0 0
          %731 = vmatpush1.bf16.msra.mxu0 0
          %732 = vmatprep.subr.bf16.mxu0 0
          %733 = vmatpush1.bf16.msra.mxu0 0
          %734 = vmatprep.subr.bf16.mxu0 0
          %735 = vmatpush1.bf16.msra.mxu0 0
          %736 = vmatprep.subr.bf16.mxu0 0
          %737 = vmatpush1.bf16.msra.mxu0 0
          %738 = vmatprep.subr.bf16.mxu0 0
          %739 = vmatpush1.bf16.msra.mxu0 0
          %740 = vmatprep.mubr.bf16.mxu0 0
          %741 = vmatmul.mubr.bf16.gmra.mrb[0].mxu0 %v706
          %v742 = vpop.f32.mrb[0].mxu0
          %v743 = vadd.f32 0.0, %v742
          %v744 = vpop.f32.mrb[0].mxu0
          %v745 = vpop.f32.mrb[0].mxu0
          %v746 = vpop.f32.mrb[0].mxu0
          %747 = vdwg.mxu0
          %748 = vst [vmem:[#allocation6] sm:$0xff] %v743
        $region108: #{dgcnn_forward.1} parent=71 // pred_fallthru
          _
        %v749 = vld [vmem:[%s616] sm:$0xf]
        %v750 = vld [vmem:[%s616 + $0x4] sm:$0xf]
        %v751 = vld [vmem:[%s616 + $0x8] sm:$0xf]
        %v752 = vld [vmem:[%s616 + $0xc] sm:$0xf]
        %v753 = vld [vmem:[#allocation2] sm:$0xff]
        %v754 = vld [vmem:[#allocation2 + $0x8] sm:$0xff]
        %v755 = vld [vmem:[#allocation2 + $0x10] sm:$0xff]
        %v756 = vld [vmem:[#allocation2 + $0x18] sm:$0xff]
        %v761 = vunpack.c.l.b16 %v749
        %v762 = vunpack.c.l.b16 %v750
        %v763 = vunpack.c.l.b16 %v751
        %v764 = vunpack.c.l.b16 %v752
        %v765 = vpack.c.b16 %v762, %v761
        %v766 = vpack.c.b16 %v764, %v763
        %vm767 = vcmask 523264
        %v769 = vsel %vm767, %v765, 0
        %v772 = vsel %vm767, %v766, 0
        %774 = vmatprep.subr.bf16.mxu0 0
        %775 = vmatpush1.bf16.msra.mxu0 %v753
        %776 = vmatprep.subr.bf16.mxu0 0
        %777 = vmatpush1.bf16.msra.mxu0 %v754
        %778 = vmatprep.subr.bf16.mxu0 0
        %779 = vmatpush1.bf16.msra.mxu0 %v755
        %780 = vmatprep.subr.bf16.mxu0 0
        %781 = vmatpush1.bf16.msra.mxu0 %v756
        %782 = vmatprep.subr.bf16.mxu0 0
        %783 = vmatpush1.bf16.msra.mxu0 0
        %784 = vmatprep.subr.bf16.mxu0 0
        %785 = vmatpush1.bf16.msra.mxu0 0
        %786 = vmatprep.subr.bf16.mxu0 0
        %787 = vmatpush1.bf16.msra.mxu0 0
        %788 = vmatprep.subr.bf16.mxu0 0
        %789 = vmatpush1.bf16.msra.mxu0 0
        %790 = vmatprep.subr.bf16.mxu0 0
        %791 = vmatpush1.bf16.msra.mxu0 0
        %792 = vmatprep.subr.bf16.mxu0 0
        %793 = vmatpush1.bf16.msra.mxu0 0
        %794 = vmatprep.subr.bf16.mxu0 0
        %795 = vmatpush1.bf16.msra.mxu0 0
        %796 = vmatprep.subr.bf16.mxu0 0
        %797 = vmatpush1.bf16.msra.mxu0 0
        %798 = vmatprep.subr.bf16.mxu0 0
        %799 = vmatpush1.bf16.msra.mxu0 0
        %800 = vmatprep.subr.bf16.mxu0 0
        %801 = vmatpush1.bf16.msra.mxu0 0
        %802 = vmatprep.subr.bf16.mxu0 0
        %803 = vmatpush1.bf16.msra.mxu0 0
        %804 = vmatprep.subr.bf16.mxu0 0
        %805 = vmatpush1.bf16.msra.mxu0 0
        %806 = vmatprep.mubr.bf16.mxu0 0
        %807 = vmatmul.mubr.bf16.gmra.mrb[0].mxu0 %v769
        %v808 = vpop.f32.mrb[0].mxu0
        %v809 = vadd.f32 0.0, %v808
        %v810 = vpop.f32.mrb[0].mxu0
        %v811 = vpop.f32.mrb[0].mxu0
        %v812 = vadd.f32 0.0, %v811
        %v813 = vpop.f32.mrb[0].mxu0
        %814 = vmatprep.mubr.bf16.mxu0 0
        %815 = vmatmul.mubr.bf16.gmra.mrb[0].mxu0 %v772
        %v816 = vpop.f32.mrb[0].mxu0
        %v817 = vadd.f32 0.0, %v816
        %v818 = vpop.f32.mrb[0].mxu0
        %v819 = vpop.f32.mrb[0].mxu0
        %v820 = vadd.f32 0.0, %v819
        %v821 = vpop.f32.mrb[0].mxu0
        %822 = vdwg.mxu0
        %v823 = vld [vmem:[%s521] sm:$0xff]
        %v824 = vld [vmem:[%s521 + $0x8] sm:$0xff]
        %v825 = vld [vmem:[%s521 + $0x10] sm:$0xff]
        %v826 = vld [vmem:[%s521 + $0x18] sm:$0xff]
        %v827 = vld [vmem:[%s521 + $0x20] sm:$0xff]
        %v828 = vld [vmem:[%s521 + $0x28] sm:$0xff]
        %v829 = vld [vmem:[%s521 + $0x30] sm:$0xff]
        %v830 = vld [vmem:[%s521 + $0x38] sm:$0xff]
        %v831 = vld [vmem:[%s521 + $0x40] sm:$0xff]
        %v832 = vld [vmem:[%s521 + $0x48] sm:$0xff]
        %v833 = vld [vmem:[%s521 + $0x50] sm:$0xff]
        %v834 = vld [vmem:[%s521 + $0x58] sm:$0xff]
        %v835 = vld [vmem:[%s521 + $0x60] sm:$0xff]
        %v836 = vld [vmem:[%s521 + $0x68] sm:$0xff]
        %v837 = vld [vmem:[%s521 + $0x70] sm:$0xff]
        %v838 = vld [vmem:[%s521 + $0x78] sm:$0xff]
        %v839 = vld [vmem:[%s529] sm:$0x1]
        %v841 = vlaneseq
        %v842 = vshrl.u32 %v841, 7
        %v843 = vsub.s32 0, %v842
        %v844 = vrot.slane %v839, %v843
        %846 = vmatprep.subr.mxu0 0.0
        %847 = vmatpush1.msra.mxu0 %v823
        %848 = vmatprep.subr.mxu0 0.0
        %849 = vmatpush1.msra.mxu0 %v824
        %850 = vmatprep.subr.mxu0 0.0
        %851 = vmatpush1.msra.mxu0 %v825
        %852 = vmatprep.subr.mxu0 0.0
        %853 = vmatpush1.msra.mxu0 %v826
        %854 = vmatprep.subr.mxu0 0.0
        %855 = vmatpush1.msra.mxu0 %v827
        %856 = vmatprep.subr.mxu0 0.0
        %857 = vmatpush1.msra.mxu0 %v828
        %858 = vmatprep.subr.mxu0 0.0
        %859 = vmatpush1.msra.mxu0 %v829
        %860 = vmatprep.subr.mxu0 0.0
        %861 = vmatpush1.msra.mxu0 %v830
        %862 = vmatprep.subr.mxu0 0.0
        %863 = vmatpush1.msra.mxu0 %v831
        %864 = vmatprep.subr.mxu0 0.0
        %865 = vmatpush1.msra.mxu0 %v832
        %866 = vmatprep.subr.mxu0 0.0
        %867 = vmatpush1.msra.mxu0 %v833
        %868 = vmatprep.subr.mxu0 0.0
        %869 = vmatpush1.msra.mxu0 %v834
        %870 = vmatprep.subr.mxu0 0.0
        %871 = vmatpush1.msra.mxu0 %v835
        %872 = vmatprep.subr.mxu0 0.0
        %873 = vmatpush1.msra.mxu0 %v836
        %874 = vmatprep.subr.mxu0 0.0
        %875 = vmatpush1.msra.mxu0 %v837
        %876 = vmatprep.subr.mxu0 0.0
        %877 = vmatpush1.msra.mxu0 %v838
        %878 = vmatprep.subr.mxu0 0.0
        %879 = vmatpush1.msra.mxu0 0.0
        %880 = vmatprep.subr.mxu0 0.0
        %881 = vmatpush1.msra.mxu0 0.0
        %882 = vmatprep.subr.mxu0 0.0
        %883 = vmatpush1.msra.mxu0 0.0
        %884 = vmatprep.subr.mxu0 0.0
        %885 = vmatpush1.msra.mxu0 0.0
        %886 = vmatprep.subr.mxu0 0.0
        %887 = vmatpush1.msra.mxu0 0.0
        %888 = vmatprep.subr.mxu0 0.0
        %889 = vmatpush1.msra.mxu0 0.0
        %890 = vmatprep.subr.mxu0 0.0
        %891 = vmatpush1.msra.mxu0 0.0
        %892 = vmatprep.subr.mxu0 0.0
        %893 = vmatpush1.msra.mxu0 0.0
        %894 = vmatprep.subr.mxu0 0.0
        %895 = vmatpush1.msra.mxu0 0.0
        %896 = vmatprep.subr.mxu0 0.0
        %897 = vmatpush1.msra.mxu0 0.0
        %898 = vmatprep.subr.mxu0 0.0
        %899 = vmatpush1.msra.mxu0 0.0
        %900 = vmatprep.subr.mxu0 0.0
        %901 = vmatpush1.msra.mxu0 0.0
        %902 = vmatprep.subr.mxu0 0.0
        %903 = vmatpush1.msra.mxu0 0.0
        %904 = vmatprep.subr.mxu0 0.0
        %905 = vmatpush1.msra.mxu0 0.0
        %906 = vmatprep.subr.mxu0 0.0
        %907 = vmatpush1.msra.mxu0 0.0
        %908 = vmatprep.subr.mxu0 0.0
        %909 = vmatpush1.msra.mxu0 0.0
        %910 = vmatprep.mubr.f32.mxu0 0.0
        %911 = vmatmul.mubr.f32.gmra.mrb[0].mxu0 %v809
        %v912 = vpop.f32.mrb[0].mxu0
        %v913 = vadd.f32 %v844, %v912
        %v914 = vpop.f32.mrb[0].mxu0
        %915 = vmatprep.mubr.f32.mxu0 0.0
        %916 = vmatmul.mubr.f32.gmra.mrb[0].mxu0 %v812
        %v917 = vpop.f32.mrb[0].mxu0
        %v918 = vadd.f32 %v844, %v917
        %v919 = vpop.f32.mrb[0].mxu0
        %920 = vmatprep.mubr.f32.mxu0 0.0
        %921 = vmatmul.mubr.f32.gmra.mrb[0].mxu0 %v817
        %v922 = vpop.f32.mrb[0].mxu0
        %v923 = vadd.f32 %v844, %v922
        %v924 = vpop.f32.mrb[0].mxu0
        %925 = vmatprep.mubr.f32.mxu0 0.0
        %926 = vmatmul.mubr.f32.gmra.mrb[0].mxu0 %v820
        %v927 = vpop.f32.mrb[0].mxu0
        %v928 = vadd.f32 %v844, %v927
        %v929 = vpop.f32.mrb[0].mxu0
        %930 = vdwg.mxu0
        %s931 = smul.u32 %s39, 32
        %v932 = vlaneseq
        %v933 = vshrl.u32 %v932, 7
        %v934 = vadd.s32 %v933, 8
        %v935 = vadd.s32 %v933, 16
        %v936 = vadd.s32 %v933, 24
        %v937 = vstv %s931
        %v938 = vadd.s32 %v937, %v933
        %v939 = vadd.s32 %v937, %v934
        %v940 = vadd.s32 %v937, %v935
        %v941 = vadd.s32 %v937, %v936
        %vm942 = vcmp.lt.s32.totalorder %v938, 60
        %vm943 = vcmp.lt.s32.totalorder %v939, 60
        %vm944 = vcmp.lt.s32.totalorder %v940, 60
        %vm945 = vcmp.lt.s32.totalorder %v941, 60
        %v946 = vsel %vm942, 1, 0
        %v947 = vsel %vm943, 1, 0
        %v948 = vsel %vm944, 1, 0
        %v949 = vsel %vm945, 1, 0
        %vm950 = vcmp.eq.s32.totalorder %v946, 1
        %vm951 = vcmp.eq.s32.totalorder %v947, 1
        %vm952 = vcmp.eq.s32.totalorder %v948, 1
        %vm953 = vcmp.eq.s32.totalorder %v949, 1
        %v954 = vsel %vm950, %v913, 0.0
        %v955 = vsel %vm951, %v918, 0.0
        %v956 = vsel %vm952, %v923, 0.0
        %v957 = vsel %vm953, %v928, 0.0
        %s958 = scalar_lea.vmem [#allocation3], %s931
        %959 = vst [vmem:[%s958] sm:$0xff] %v954
        %960 = vst [vmem:[%s958 + $0x8] sm:$0xff] %v955
        %961 = vst [vmem:[%s958 + $0x10] sm:$0xff] %v956
        %962 = vst [vmem:[%s958 + $0x18] sm:$0xff] %v957
        %v963 = vld [vmem:[#allocation4] sm:$0x1]
        %v964 = vadd.f32 %v954, %v955
        %v965 = vadd.f32 %v964, %v956
        %v966 = vadd.f32 %v965, %v957
        %v967 = vrot.slane %v966, 4
        %v968 = vadd.f32 %v966, %v967
        %v969 = vrot.slane %v968, 2
        %v970 = vadd.f32 %v968, %v969
        %v971 = vrot.slane %v970, 1
        %v972 = vadd.f32 %v970, %v971
        %v973 = vadd.f32 %v963, %v972
        %974 = vst [vmem:[#allocation4] sm:$0x1] %v973
        %v975 = vld [vmem:[#allocation5] sm:$0x1]
        %v976 = vmul.f32 %v954, %v954
        %v977 = vmul.f32 %v955, %v955
        %v978 = vmul.f32 %v956, %v956
        %v979 = vmul.f32 %v957, %v957
        %v980 = vadd.f32 %v976, %v977
        %v981 = vadd.f32 %v980, %v978
        %v982 = vadd.f32 %v981, %v979
        %v983 = vrot.slane %v982, 4
        %v984 = vadd.f32 %v982, %v983
        %v985 = vrot.slane %v984, 2
        %v986 = vadd.f32 %v984, %v985
        %v987 = vrot.slane %v986, 1
        %v988 = vadd.f32 %v986, %v987
        %v989 = vadd.f32 %v975, %v988
        %990 = vst [vmem:[#allocation5] sm:$0x1] %v989
        %p991 = scmp.eq.s32.totalorder %s39, 1
        // Predicated region
        $region109: #{dgcnn_forward.1} parent=71 // pred_check
          %p992 = pneg %p991
        $region110: #{dgcnn_forward.1} parent=71 // pred_check_branch
          %994 = sbr.rel (%p992) target = $region112
        $region111: #{dgcnn_forward.1} parent=71 // pred_region
          %v995 = vld [vmem:[#allocation4] sm:$0x1]
          %v996 = vmul.f32 %v995, 0.016666668
          %v997 = vld [vmem:[#allocation5] sm:$0x1]
          %v998 = vmul.f32 %v997, 0.016666668
          %v999 = vmul.f32 %v996, %v996
          %v1000 = vsub.f32 %v998, %v999
          %v1001 = vld [vmem:[%s537] sm:$0x1]
          %v1002 = vadd.f32 %v1000, 1e-05
          %v1003 = vrsqrt.pop %v1002
          %v1004 = vmul.f32 %v1001, %v1003
          %v1005 = vld [vmem:[%s545] sm:$0x1]
          %v1006 = vmul.f32 %v996, %v1004
          %v1007 = vsub.f32 %v1005, %v1006
          %v1008 = vld [vmem:[#allocation3] sm:$0xff]
          %v1009 = vld [vmem:[#allocation3 + $0x8] sm:$0xff]
          %v1010 = vld [vmem:[#allocation3 + $0x10] sm:$0xff]
          %v1011 = vld [vmem:[#allocation3 + $0x18] sm:$0xff]
          %v1012 = vld [vmem:[#allocation3 + $0x20] sm:$0xff]
          %v1013 = vld [vmem:[#allocation3 + $0x28] sm:$0xff]
          %v1014 = vld [vmem:[#allocation3 + $0x30] sm:$0xff]
          %v1015 = vld [vmem:[#allocation3 + $0x38] sm:$0xff]
          %v1017 = vlaneseq
          %v1018 = vshrl.u32 %v1017, 7
          %v1019 = vsub.s32 0, %v1018
          %v1020 = vrot.slane %v1004, %v1019
          %v1022 = vmul.f32 %v1008, %v1020
          %v1023 = vmul.f32 %v1009, %v1020
          %v1024 = vmul.f32 %v1010, %v1020
          %v1025 = vmul.f32 %v1011, %v1020
          %v1026 = vmul.f32 %v1012, %v1020
          %v1027 = vmul.f32 %v1013, %v1020
          %v1028 = vmul.f32 %v1014, %v1020
          %v1029 = vmul.f32 %v1015, %v1020
          %v1031 = vlaneseq
          %v1032 = vshrl.u32 %v1031, 7
          %v1033 = vsub.s32 0, %v1032
          %v1034 = vrot.slane %v1007, %v1033
          %v1036 = vadd.f32 %v1022, %v1034
          %v1037 = vadd.f32 %v1023, %v1034
          %v1038 = vadd.f32 %v1024, %v1034
          %v1039 = vadd.f32 %v1025, %v1034
          %v1040 = vadd.f32 %v1026, %v1034
          %v1041 = vadd.f32 %v1027, %v1034
          %v1042 = vadd.f32 %v1028, %v1034
          %v1043 = vadd.f32 %v1029, %v1034
          %v1044 = vmax.f32 %v1036, 0.0
          %v1045 = vmax.f32 %v1037, 0.0
          %v1046 = vmax.f32 %v1038, 0.0
          %v1047 = vmax.f32 %v1039, 0.0
          %v1048 = vmax.f32 %v1040, 0.0
          %v1049 = vmax.f32 %v1041, 0.0
          %v1050 = vmax.f32 %v1042, 0.0
          %v1051 = vmax.f32 %v1043, 0.0
          %v1052 = vpack.c.bf16 %v1045, %v1044
          %v1053 = vpack.c.bf16 %v1047, %v1046
          %v1054 = vpack.c.bf16 %v1049, %v1048
          %v1055 = vpack.c.bf16 %v1051, %v1050
          %1056 = vst [vmem:[#allocation2] sm:$0xff] %v1052
          %1057 = vst [vmem:[#allocation2 + $0x8] sm:$0xff] %v1053
          %1058 = vst [vmem:[#allocation2 + $0x10] sm:$0xff] %v1054
          %1059 = vst [vmem:[#allocation2 + $0x18] sm:$0xff] %v1055
          %v1060 = vld [vmem:[%s2] sm:$0xf]
          %v1062 = vsel %vm767, %v1060, 0
          %1064 = vmatprep.subr.bf16.mxu0 0
          %1065 = vmatpush1.bf16.msra.mxu0 %v1052
          %1066 = vmatprep.subr.bf16.mxu0 0
          %1067 = vmatpush1.bf16.msra.mxu0 %v1053
          %1068 = vmatprep.subr.bf16.mxu0 0
          %1069 = vmatpush1.bf16.msra.mxu0 %v1054
          %1070 = vmatprep.subr.bf16.mxu0 0
          %1071 = vmatpush1.bf16.msra.mxu0 %v1055
          %1072 = vmatprep.subr.bf16.mxu0 0
          %1073 = vmatpush1.bf16.msra.mxu0 0
          %1074 = vmatprep.subr.bf16.mxu0 0
          %1075 = vmatpush1.bf16.msra.mxu0 0
          %1076 = vmatprep.subr.bf16.mxu0 0
          %1077 = vmatpush1.bf16.msra.mxu0 0
          %1078 = vmatprep.subr.bf16.mxu0 0
          %1079 = vmatpush1.bf16.msra.mxu0 0
          %1080 = vmatprep.subr.bf16.mxu0 0
          %1081 = vmatpush1.bf16.msra.mxu0 0
          %1082 = vmatprep.subr.bf16.mxu0 0
          %1083 = vmatpush1.bf16.msra.mxu0 0
          %1084 = vmatprep.subr.bf16.mxu0 0
          %1085 = vmatpush1.bf16.msra.mxu0 0
          %1086 = vmatprep.subr.bf16.mxu0 0
          %1087 = vmatpush1.bf16.msra.mxu0 0
          %1088 = vmatprep.subr.bf16.mxu0 0
          %1089 = vmatpush1.bf16.msra.mxu0 0
          %1090 = vmatprep.subr.bf16.mxu0 0
          %1091 = vmatpush1.bf16.msra.mxu0 0
          %1092 = vmatprep.subr.bf16.mxu0 0
          %1093 = vmatpush1.bf16.msra.mxu0 0
          %1094 = vmatprep.subr.bf16.mxu0 0
          %1095 = vmatpush1.bf16.msra.mxu0 0
          %1096 = vmatprep.mubr.bf16.mxu0 0
          %1097 = vmatmul.mubr.bf16.gmra.mrb[0].mxu0 %v1062
          %v1098 = vpop.f32.mrb[0].mxu0
          %v1099 = vadd.f32 0.0, %v1098
          %v1100 = vpop.f32.mrb[0].mxu0
          %v1101 = vpop.f32.mrb[0].mxu0
          %v1102 = vpop.f32.mrb[0].mxu0
          %1103 = vdwg.mxu0
          // Predicated region
          $region113: #{dgcnn_forward.1} parent=111 // pred_check
            %p1104 = pneg %p625
          $region114: #{dgcnn_forward.1} parent=111 // pred_check_branch
            %1106 = sbr.rel (%p1104) target = $region116
          $region115: #{dgcnn_forward.1} parent=111 // pred_region
            %1107 = vst [vmem:[#allocation6 + $0x8] sm:$0xff] %v1099
          $region116: #{dgcnn_forward.1} parent=111 // pred_fallthru
            _
          %p1108 = scmp.eq.s32.totalorder %s38, 1
          // Predicated region
          $region117: #{dgcnn_forward.1} parent=111 // pred_check
            %p1109 = pneg %p1108
          $region118: #{dgcnn_forward.1} parent=111 // pred_check_branch
            %1111 = sbr.rel (%p1109) target = $region120
          $region119: #{dgcnn_forward.1} parent=111 // pred_region
            %1112 = vst [vmem:[#allocation6 + $0x10] sm:$0xff] %v1099
          $region120: #{dgcnn_forward.1} parent=111 // pred_fallthru
            _
          %p1113 = scmp.eq.s32.totalorder %s38, 2
          // Predicated region
          $region121: #{dgcnn_forward.1} parent=111 // pred_check
            %p1114 = pneg %p1113
          $region122: #{dgcnn_forward.1} parent=111 // pred_check_branch
            %1116 = sbr.rel (%p1114) target = $region124
          $region123: #{dgcnn_forward.1} parent=111 // pred_region
            %1117 = vst [vmem:[#allocation6 + $0x18] sm:$0xff] %v1099
          $region124: #{dgcnn_forward.1} parent=111 // pred_fallthru
            _
          %p1118 = scmp.eq.s32.totalorder %s38, 3
          // Predicated region
          $region125: #{dgcnn_forward.1} parent=111 // pred_check
            %p1119 = pneg %p1118
          $region126: #{dgcnn_forward.1} parent=111 // pred_check_branch
            %1121 = sbr.rel (%p1119) target = $region128
          $region127: #{dgcnn_forward.1} parent=111 // pred_region
            %1122 = vst [vmem:[#allocation6 + $0x20] sm:$0xff] %v1099
            %v1123 = vld [vmem:[#allocation6] sm:$0xff]
            %v1124 = vld [vmem:[#allocation6 + $0x8] sm:$0xff]
            %v1125 = vld [vmem:[#allocation6 + $0x10] sm:$0xff]
            %v1126 = vld [vmem:[#allocation6 + $0x18] sm:$0xff]
            %v1127 = vld [vmem:[#allocation6 + $0x20] sm:$0xff]
            %v1128 = vld [vmem:[#allocation14] sm:$0xff]
            %v1129 = vld [vmem:[#allocation14 + $0x8] sm:$0xff]
            %v1130 = vld [vmem:[#allocation14 + $0x10] sm:$0xff]
            %v1131 = vld [vmem:[#allocation14 + $0x18] sm:$0xff]
            %v1132 = vld [vmem:[#allocation14 + $0x20] sm:$0xff]
            %v1133 = vld [vmem:[#allocation14 + $0x28] sm:$0xff]
            %v1134 = vld [vmem:[#allocation14 + $0x30] sm:$0xff]
            %v1135 = vld [vmem:[#allocation14 + $0x38] sm:$0xff]
            %v1136 = vld [vmem:[#allocation14 + $0x40] sm:$0xff]
            %v1137 = vld [vmem:[#allocation14 + $0x48] sm:$0xff]
            %v1138 = vld [vmem:[#allocation14 + $0x50] sm:$0xff]
            %v1139 = vld [vmem:[#allocation14 + $0x58] sm:$0xff]
            %v1140 = vld [vmem:[#allocation14 + $0x60] sm:$0xff]
            %v1141 = vld [vmem:[#allocation14 + $0x68] sm:$0xff]
            %v1142 = vld [vmem:[#allocation14 + $0x70] sm:$0xff]
            %v1143 = vld [vmem:[#allocation14 + $0x78] sm:$0xff]
            %v1144 = vld [vmem:[#allocation14 + $0x80] sm:$0xff]
            %v1145 = vld [vmem:[#allocation14 + $0x88] sm:$0xff]
            %v1146 = vld [vmem:[#allocation14 + $0x90] sm:$0xff]
            %v1147 = vld [vmem:[#allocation14 + $0x98] sm:$0xff]
            %v1148 = vld [vmem:[#allocation14 + $0xa0] sm:$0xff]
            %v1149 = vld [vmem:[#allocation14 + $0xa8] sm:$0xff]
            %v1150 = vld [vmem:[#allocation14 + $0xb0] sm:$0xff]
            %v1151 = vld [vmem:[#allocation14 + $0xb8] sm:$0xff]
            %v1152 = vld [vmem:[#allocation14 + $0xc0] sm:$0xff]
            %v1153 = vld [vmem:[#allocation14 + $0xc8] sm:$0xff]
            %v1154 = vld [vmem:[#allocation14 + $0xd0] sm:$0xff]
            %v1155 = vld [vmem:[#allocation14 + $0xd8] sm:$0xff]
            %v1156 = vld [vmem:[#allocation14 + $0xe0] sm:$0xff]
            %v1157 = vld [vmem:[#allocation14 + $0xe8] sm:$0xff]
            %v1158 = vld [vmem:[#allocation14 + $0xf0] sm:$0xff]
            %v1159 = vld [vmem:[#allocation14 + $0xf8] sm:$0xff]
            %v1160 = vld [vmem:[#allocation14 + $0x100] sm:$0xff]
            %v1161 = vld [vmem:[#allocation14 + $0x108] sm:$0xff]
            %v1162 = vld [vmem:[#allocation14 + $0x110] sm:$0xff]
            %v1163 = vld [vmem:[#allocation14 + $0x118] sm:$0xff]
            %v1164 = vld [vmem:[#allocation14 + $0x120] sm:$0xff]
            %v1165 = vld [vmem:[#allocation14 + $0x128] sm:$0xff]
            %v1166 = vld [vmem:[#allocation14 + $0x130] sm:$0xff]
            %v1167 = vld [vmem:[#allocation14 + $0x138] sm:$0xff]
            %v1168 = vld [vmem:[#allocation14 + $0x140] sm:$0xff]
            %v1169 = vld [vmem:[#allocation14 + $0x148] sm:$0xff]
            %v1170 = vld [vmem:[#allocation14 + $0x150] sm:$0xff]
            %v1171 = vld [vmem:[#allocation14 + $0x158] sm:$0xff]
            %v1172 = vld [vmem:[#allocation14 + $0x160] sm:$0xff]
            %v1173 = vld [vmem:[#allocation14 + $0x168] sm:$0xff]
            %v1174 = vld [vmem:[#allocation14 + $0x170] sm:$0xff]
            %v1175 = vld [vmem:[#allocation14 + $0x178] sm:$0xff]
            %v1176 = vld [vmem:[#allocation14 + $0x180] sm:$0xff]
            %v1177 = vld [vmem:[#allocation14 + $0x188] sm:$0xff]
            %v1178 = vld [vmem:[#allocation14 + $0x190] sm:$0xff]
            %v1179 = vld [vmem:[#allocation14 + $0x198] sm:$0xff]
            %v1180 = vld [vmem:[#allocation14 + $0x1a0] sm:$0xff]
            %v1181 = vld [vmem:[#allocation14 + $0x1a8] sm:$0xff]
            %v1182 = vld [vmem:[#allocation14 + $0x1b0] sm:$0xff]
            %v1183 = vld [vmem:[#allocation14 + $0x1b8] sm:$0xff]
            %v1184 = vld [vmem:[#allocation14 + $0x1c0] sm:$0xff]
            %v1185 = vld [vmem:[#allocation14 + $0x1c8] sm:$0xff]
            %v1186 = vld [vmem:[#allocation14 + $0x1d0] sm:$0xff]
            %v1187 = vld [vmem:[#allocation14 + $0x1d8] sm:$0xff]
            %v1188 = vld [vmem:[#allocation14 + $0x1e0] sm:$0xff]
            %v1189 = vld [vmem:[#allocation14 + $0x1e8] sm:$0xff]
            %v1190 = vld [vmem:[#allocation14 + $0x1f0] sm:$0xff]
            %v1191 = vld [vmem:[#allocation14 + $0x1f8] sm:$0xff]
            %v1192 = vld [vmem:[#allocation14 + $0x200] sm:$0xff]
            %v1193 = vld [vmem:[#allocation14 + $0x208] sm:$0xff]
            %v1194 = vld [vmem:[#allocation14 + $0x210] sm:$0xff]
            %v1195 = vld [vmem:[#allocation14 + $0x218] sm:$0xff]
            %v1196 = vld [vmem:[#allocation14 + $0x220] sm:$0xff]
            %v1197 = vld [vmem:[#allocation14 + $0x228] sm:$0xff]
            %v1198 = vld [vmem:[#allocation14 + $0x230] sm:$0xff]
            %v1199 = vld [vmem:[#allocation14 + $0x238] sm:$0xff]
            %v1200 = vld [vmem:[#allocation14 + $0x240] sm:$0xff]
            %v1201 = vld [vmem:[#allocation14 + $0x248] sm:$0xff]
            %v1202 = vld [vmem:[#allocation14 + $0x250] sm:$0xff]
            %v1203 = vld [vmem:[#allocation14 + $0x258] sm:$0xff]
            %v1204 = vld [vmem:[#allocation14 + $0x260] sm:$0xff]
            %v1205 = vld [vmem:[#allocation14 + $0x268] sm:$0xff]
            %v1206 = vld [vmem:[#allocation14 + $0x270] sm:$0xff]
            %v1207 = vld [vmem:[#allocation14 + $0x278] sm:$0xff]
            %v1208 = vld [vmem:[%s8] sm:$0x1]
            %v1210 = vlaneseq
            %v1211 = vshrl.u32 %v1210, 7
            %v1212 = vsub.s32 0, %v1211
            %v1213 = vrot.slane %v1208, %v1212
            %1215 = vmatprep.subr.mxu0 0.0
            %1216 = vmatpush1.msra.mxu0 %v1128
            %1217 = vmatprep.subr.mxu0 0.0
            %1218 = vmatpush1.msra.mxu0 %v1129
            %1219 = vmatprep.subr.mxu0 0.0
            %1220 = vmatpush1.msra.mxu0 %v1130
            %1221 = vmatprep.subr.mxu0 0.0
            %1222 = vmatpush1.msra.mxu0 %v1131
            %1223 = vmatprep.subr.mxu0 0.0
            %1224 = vmatpush1.msra.mxu0 %v1132
            %1225 = vmatprep.subr.mxu0 0.0
            %1226 = vmatpush1.msra.mxu0 %v1133
            %1227 = vmatprep.subr.mxu0 0.0
            %1228 = vmatpush1.msra.mxu0 %v1134
            %1229 = vmatprep.subr.mxu0 0.0
            %1230 = vmatpush1.msra.mxu0 %v1135
            %1231 = vmatprep.subr.mxu0 0.0
            %1232 = vmatpush1.msra.mxu0 %v1136
            %1233 = vmatprep.subr.mxu0 0.0
            %1234 = vmatpush1.msra.mxu0 %v1137
            %1235 = vmatprep.subr.mxu0 0.0
            %1236 = vmatpush1.msra.mxu0 %v1138
            %1237 = vmatprep.subr.mxu0 0.0
            %1238 = vmatpush1.msra.mxu0 %v1139
            %1239 = vmatprep.subr.mxu0 0.0
            %1240 = vmatpush1.msra.mxu0 %v1140
            %1241 = vmatprep.subr.mxu0 0.0
            %1242 = vmatpush1.msra.mxu0 %v1141
            %1243 = vmatprep.subr.mxu0 0.0
            %1244 = vmatpush1.msra.mxu0 %v1142
            %1245 = vmatprep.subr.mxu0 0.0
            %1246 = vmatpush1.msra.mxu0 %v1143
            %1247 = vmatprep.subr.mxu0 0.0
            %1248 = vmatpush1.msra.mxu0 %v1144
            %1249 = vmatprep.subr.mxu0 0.0
            %1250 = vmatpush1.msra.mxu0 %v1145
            %1251 = vmatprep.subr.mxu0 0.0
            %1252 = vmatpush1.msra.mxu0 %v1146
            %1253 = vmatprep.subr.mxu0 0.0
            %1254 = vmatpush1.msra.mxu0 %v1147
            %1255 = vmatprep.subr.mxu0 0.0
            %1256 = vmatpush1.msra.mxu0 %v1148
            %1257 = vmatprep.subr.mxu0 0.0
            %1258 = vmatpush1.msra.mxu0 %v1149
            %1259 = vmatprep.subr.mxu0 0.0
            %1260 = vmatpush1.msra.mxu0 %v1150
            %1261 = vmatprep.subr.mxu0 0.0
            %1262 = vmatpush1.msra.mxu0 %v1151
            %1263 = vmatprep.subr.mxu0 0.0
            %1264 = vmatpush1.msra.mxu0 %v1152
            %1265 = vmatprep.subr.mxu0 0.0
            %1266 = vmatpush1.msra.mxu0 %v1153
            %1267 = vmatprep.subr.mxu0 0.0
            %1268 = vmatpush1.msra.mxu0 %v1154
            %1269 = vmatprep.subr.mxu0 0.0
            %1270 = vmatpush1.msra.mxu0 %v1155
            %1271 = vmatprep.subr.mxu0 0.0
            %1272 = vmatpush1.msra.mxu0 %v1156
            %1273 = vmatprep.subr.mxu0 0.0
            %1274 = vmatpush1.msra.mxu0 %v1157
            %1275 = vmatprep.subr.mxu0 0.0
            %1276 = vmatpush1.msra.mxu0 %v1158
            %1277 = vmatprep.subr.mxu0 0.0
            %1278 = vmatpush1.msra.mxu0 %v1159
            %1279 = vmatprep.mubr.f32.mxu0 %v1124
            %1280 = vmatmul.mubr.f32.gmra.mrb[0].mxu0 %v1123
            %v1281 = vpop.f32.mrb[0].mxu0
            %v1282 = vadd.f32 %v1213, %v1281
            %v1283 = vpop.f32.mrb[0].mxu0
            %1284 = vdwg.mxu0
            %1285 = vmatprep.subr.mxu0 0.0
            %1286 = vmatpush1.msra.mxu0 %v1160
            %1287 = vmatprep.subr.mxu0 0.0
            %1288 = vmatpush1.msra.mxu0 %v1161
            %1289 = vmatprep.subr.mxu0 0.0
            %1290 = vmatpush1.msra.mxu0 %v1162
            %1291 = vmatprep.subr.mxu0 0.0
            %1292 = vmatpush1.msra.mxu0 %v1163
            %1293 = vmatprep.subr.mxu0 0.0
            %1294 = vmatpush1.msra.mxu0 %v1164
            %1295 = vmatprep.subr.mxu0 0.0
            %1296 = vmatpush1.msra.mxu0 %v1165
            %1297 = vmatprep.subr.mxu0 0.0
            %1298 = vmatpush1.msra.mxu0 %v1166
            %1299 = vmatprep.subr.mxu0 0.0
            %1300 = vmatpush1.msra.mxu0 %v1167
            %1301 = vmatprep.subr.mxu0 0.0
            %1302 = vmatpush1.msra.mxu0 %v1168
            %1303 = vmatprep.subr.mxu0 0.0
            %1304 = vmatpush1.msra.mxu0 %v1169
            %1305 = vmatprep.subr.mxu0 0.0
            %1306 = vmatpush1.msra.mxu0 %v1170
            %1307 = vmatprep.subr.mxu0 0.0
            %1308 = vmatpush1.msra.mxu0 %v1171
            %1309 = vmatprep.subr.mxu0 0.0
            %1310 = vmatpush1.msra.mxu0 %v1172
            %1311 = vmatprep.subr.mxu0 0.0
            %1312 = vmatpush1.msra.mxu0 %v1173
            %1313 = vmatprep.subr.mxu0 0.0
            %1314 = vmatpush1.msra.mxu0 %v1174
            %1315 = vmatprep.subr.mxu0 0.0
            %1316 = vmatpush1.msra.mxu0 %v1175
            %1317 = vmatprep.subr.mxu0 0.0
            %1318 = vmatpush1.msra.mxu0 %v1176
            %1319 = vmatprep.subr.mxu0 0.0
            %1320 = vmatpush1.msra.mxu0 %v1177
            %1321 = vmatprep.subr.mxu0 0.0
            %1322 = vmatpush1.msra.mxu0 %v1178
            %1323 = vmatprep.subr.mxu0 0.0
            %1324 = vmatpush1.msra.mxu0 %v1179
            %1325 = vmatprep.subr.mxu0 0.0
            %1326 = vmatpush1.msra.mxu0 %v1180
            %1327 = vmatprep.subr.mxu0 0.0
            %1328 = vmatpush1.msra.mxu0 %v1181
            %1329 = vmatprep.subr.mxu0 0.0
            %1330 = vmatpush1.msra.mxu0 %v1182
            %1331 = vmatprep.subr.mxu0 0.0
            %1332 = vmatpush1.msra.mxu0 %v1183
            %1333 = vmatprep.subr.mxu0 0.0
            %1334 = vmatpush1.msra.mxu0 %v1184
            %1335 = vmatprep.subr.mxu0 0.0
            %1336 = vmatpush1.msra.mxu0 %v1185
            %1337 = vmatprep.subr.mxu0 0.0
            %1338 = vmatpush1.msra.mxu0 %v1186
            %1339 = vmatprep.subr.mxu0 0.0
            %1340 = vmatpush1.msra.mxu0 %v1187
            %1341 = vmatprep.subr.mxu0 0.0
            %1342 = vmatpush1.msra.mxu0 %v1188
            %1343 = vmatprep.subr.mxu0 0.0
            %1344 = vmatpush1.msra.mxu0 %v1189
            %1345 = vmatprep.subr.mxu0 0.0
            %1346 = vmatpush1.msra.mxu0 %v1190
            %1347 = vmatprep.subr.mxu0 0.0
            %1348 = vmatpush1.msra.mxu0 %v1191
            %1349 = vmatprep.mubr.f32.mxu0 %v1126
            %1350 = vmatmul.mubr.f32.gmra.mrb[0].mxu0 %v1125
            %v1351 = vpop.f32.mrb[0].mxu0
            %v1352 = vadd.f32 %v1282, %v1351
            %v1353 = vpop.f32.mrb[0].mxu0
            %1354 = vdwg.mxu0
            %1355 = vmatprep.subr.mxu0 0.0
            %1356 = vmatpush1.msra.mxu0 %v1192
            %1357 = vmatprep.subr.mxu0 0.0
            %1358 = vmatpush1.msra.mxu0 %v1193
            %1359 = vmatprep.subr.mxu0 0.0
            %1360 = vmatpush1.msra.mxu0 %v1194
            %1361 = vmatprep.subr.mxu0 0.0
            %1362 = vmatpush1.msra.mxu0 %v1195
            %1363 = vmatprep.subr.mxu0 0.0
            %1364 = vmatpush1.msra.mxu0 %v1196
            %1365 = vmatprep.subr.mxu0 0.0
            %1366 = vmatpush1.msra.mxu0 %v1197
            %1367 = vmatprep.subr.mxu0 0.0
            %1368 = vmatpush1.msra.mxu0 %v1198
            %1369 = vmatprep.subr.mxu0 0.0
            %1370 = vmatpush1.msra.mxu0 %v1199
            %1371 = vmatprep.subr.mxu0 0.0
            %1372 = vmatpush1.msra.mxu0 %v1200
            %1373 = vmatprep.subr.mxu0 0.0
            %1374 = vmatpush1.msra.mxu0 %v1201
            %1375 = vmatprep.subr.mxu0 0.0
            %1376 = vmatpush1.msra.mxu0 %v1202
            %1377 = vmatprep.subr.mxu0 0.0
            %1378 = vmatpush1.msra.mxu0 %v1203
            %1379 = vmatprep.subr.mxu0 0.0
            %1380 = vmatpush1.msra.mxu0 %v1204
            %1381 = vmatprep.subr.mxu0 0.0
            %1382 = vmatpush1.msra.mxu0 %v1205
            %1383 = vmatprep.subr.mxu0 0.0
            %1384 = vmatpush1.msra.mxu0 %v1206
            %1385 = vmatprep.subr.mxu0 0.0
            %1386 = vmatpush1.msra.mxu0 %v1207
            %1387 = vmatprep.subr.mxu0 0.0
            %1388 = vmatpush1.msra.mxu0 0.0
            %1389 = vmatprep.subr.mxu0 0.0
            %1390 = vmatpush1.msra.mxu0 0.0
            %1391 = vmatprep.subr.mxu0 0.0
            %1392 = vmatpush1.msra.mxu0 0.0
            %1393 = vmatprep.subr.mxu0 0.0
            %1394 = vmatpush1.msra.mxu0 0.0
            %1395 = vmatprep.subr.mxu0 0.0
            %1396 = vmatpush1.msra.mxu0 0.0
            %1397 = vmatprep.subr.mxu0 0.0
            %1398 = vmatpush1.msra.mxu0 0.0
            %1399 = vmatprep.subr.mxu0 0.0
            %1400 = vmatpush1.msra.mxu0 0.0
            %1401 = vmatprep.subr.mxu0 0.0
            %1402 = vmatpush1.msra.mxu0 0.0
            %1403 = vmatprep.subr.mxu0 0.0
            %1404 = vmatpush1.msra.mxu0 0.0
            %1405 = vmatprep.subr.mxu0 0.0
            %1406 = vmatpush1.msra.mxu0 0.0
            %1407 = vmatprep.subr.mxu0 0.0
            %1408 = vmatpush1.msra.mxu0 0.0
            %1409 = vmatprep.subr.mxu0 0.0
            %1410 = vmatpush1.msra.mxu0 0.0
            %1411 = vmatprep.subr.mxu0 0.0
            %1412 = vmatpush1.msra.mxu0 0.0
            %1413 = vmatprep.subr.mxu0 0.0
            %1414 = vmatpush1.msra.mxu0 0.0
            %1415 = vmatprep.subr.mxu0 0.0
            %1416 = vmatpush1.msra.mxu0 0.0
            %1417 = vmatprep.subr.mxu0 0.0
            %1418 = vmatpush1.msra.mxu0 0.0
            %1419 = vmatprep.mubr.f32.mxu0 0.0
            %1420 = vmatmul.mubr.f32.gmra.mrb[0].mxu0 %v1127
            %v1421 = vpop.f32.mrb[0].mxu0
            %v1422 = vadd.f32 %v1352, %v1421
            %v1423 = vpop.f32.mrb[0].mxu0
            %1424 = vdwg.mxu0
            %v1425 = vmax.f32 %v1422, 0.0
            %v1426 = vld [vmem:[%s9] sm:$0xff]
            %v1427 = vld [vmem:[%s9 + $0x8] sm:$0xff]
            %v1428 = vld [vmem:[%s9 + $0x10] sm:$0xff]
            %v1429 = vld [vmem:[%s9 + $0x18] sm:$0xff]
            %v1430 = vld [vmem:[%s9 + $0x20] sm:$0xff]
            %v1431 = vld [vmem:[%s9 + $0x28] sm:$0xff]
            %v1432 = vld [vmem:[%s9 + $0x30] sm:$0xff]
            %v1433 = vld [vmem:[%s9 + $0x38] sm:$0xff]
            %v1434 = vld [vmem:[%s9 + $0x40] sm:$0xff]
            %v1435 = vld [vmem:[%s9 + $0x48] sm:$0xff]
            %v1436 = vld [vmem:[%s9 + $0x50] sm:$0xff]
            %v1437 = vld [vmem:[%s9 + $0x58] sm:$0xff]
            %v1438 = vld [vmem:[%s9 + $0x60] sm:$0xff]
            %v1439 = vld [vmem:[%s9 + $0x68] sm:$0xff]
            %v1440 = vld [vmem:[%s9 + $0x70] sm:$0xff]
            %v1441 = vld [vmem:[%s9 + $0x78] sm:$0xff]
            %v1442 = vld [vmem:[#allocation15] sm:$0x1]
            %v1444 = vlaneseq
            %v1445 = vshrl.u32 %v1444, 7
            %v1446 = vsub.s32 0, %v1445
            %v1447 = vrot.slane %v1442, %v1446
            %1449 = vmatprep.subr.mxu0 0.0
            %1450 = vmatpush1.msra.mxu0 %v1426
            %1451 = vmatprep.subr.mxu0 0.0
            %1452 = vmatpush1.msra.mxu0 %v1427
            %1453 = vmatprep.subr.mxu0 0.0
            %1454 = vmatpush1.msra.mxu0 %v1428
            %1455 = vmatprep.subr.mxu0 0.0
            %1456 = vmatpush1.msra.mxu0 %v1429
            %1457 = vmatprep.subr.mxu0 0.0
            %1458 = vmatpush1.msra.mxu0 %v1430
            %1459 = vmatprep.subr.mxu0 0.0
            %1460 = vmatpush1.msra.mxu0 %v1431
            %1461 = vmatprep.subr.mxu0 0.0
            %1462 = vmatpush1.msra.mxu0 %v1432
            %1463 = vmatprep.subr.mxu0 0.0
            %1464 = vmatpush1.msra.mxu0 %v1433
            %1465 = vmatprep.subr.mxu0 0.0
            %1466 = vmatpush1.msra.mxu0 %v1434
            %1467 = vmatprep.subr.mxu0 0.0
            %1468 = vmatpush1.msra.mxu0 %v1435
            %1469 = vmatprep.subr.mxu0 0.0
            %1470 = vmatpush1.msra.mxu0 %v1436
            %1471 = vmatprep.subr.mxu0 0.0
            %1472 = vmatpush1.msra.mxu0 %v1437
            %1473 = vmatprep.subr.mxu0 0.0
            %1474 = vmatpush1.msra.mxu0 %v1438
            %1475 = vmatprep.subr.mxu0 0.0
            %1476 = vmatpush1.msra.mxu0 %v1439
            %1477 = vmatprep.subr.mxu0 0.0
            %1478 = vmatpush1.msra.mxu0 %v1440
            %1479 = vmatprep.subr.mxu0 0.0
            %1480 = vmatpush1.msra.mxu0 %v1441
            %1481 = vmatprep.subr.mxu0 0.0
            %1482 = vmatpush1.msra.mxu0 0.0
            %1483 = vmatprep.subr.mxu0 0.0
            %1484 = vmatpush1.msra.mxu0 0.0
            %1485 = vmatprep.subr.mxu0 0.0
            %1486 = vmatpush1.msra.mxu0 0.0
            %1487 = vmatprep.subr.mxu0 0.0
            %1488 = vmatpush1.msra.mxu0 0.0
            %1489 = vmatprep.subr.mxu0 0.0
            %1490 = vmatpush1.msra.mxu0 0.0
            %1491 = vmatprep.subr.mxu0 0.0
            %1492 = vmatpush1.msra.mxu0 0.0
            %1493 = vmatprep.subr.mxu0 0.0
            %1494 = vmatpush1.msra.mxu0 0.0
            %1495 = vmatprep.subr.mxu0 0.0
            %1496 = vmatpush1.msra.mxu0 0.0
            %1497 = vmatprep.subr.mxu0 0.0
            %1498 = vmatpush1.msra.mxu0 0.0
            %1499 = vmatprep.subr.mxu0 0.0
            %1500 = vmatpush1.msra.mxu0 0.0
            %1501 = vmatprep.subr.mxu0 0.0
            %1502 = vmatpush1.msra.mxu0 0.0
            %1503 = vmatprep.subr.mxu0 0.0
            %1504 = vmatpush1.msra.mxu0 0.0
            %1505 = vmatprep.subr.mxu0 0.0
            %1506 = vmatpush1.msra.mxu0 0.0
            %1507 = vmatprep.subr.mxu0 0.0
            %1508 = vmatpush1.msra.mxu0 0.0
            %1509 = vmatprep.subr.mxu0 0.0
            %1510 = vmatpush1.msra.mxu0 0.0
            %1511 = vmatprep.subr.mxu0 0.0
            %1512 = vmatpush1.msra.mxu0 0.0
            %1513 = vmatprep.mubr.f32.mxu0 0.0
            %1514 = vmatmul.mubr.f32.gmra.mrb[0].mxu0 %v1425
            %v1515 = vpop.f32.mrb[0].mxu0
            %v1516 = vadd.f32 %v1447, %v1515
            %v1517 = vpop.f32.mrb[0].mxu0
            %1518 = vdwg.mxu0
            %v1519 = vmax.f32 %v1516, 0.0
            %v1520 = vld [vmem:[%s11] sm:$0xff]
            %v1521 = vld [vmem:[%s11 + $0x8] sm:$0xff]
            %v1522 = vld [vmem:[%s11 + $0x10] sm:$0xff]
            %v1523 = vld [vmem:[%s11 + $0x18] sm:$0xff]
            %v1524 = vld [vmem:[%s11 + $0x20] sm:$0xff]
            %v1525 = vld [vmem:[%s11 + $0x28] sm:$0xff]
            %v1526 = vld [vmem:[%s11 + $0x30] sm:$0xff]
            %v1527 = vld [vmem:[%s11 + $0x38] sm:$0xff]
            %v1528 = vld [vmem:[%s11 + $0x40] sm:$0xff]
            %v1529 = vld [vmem:[%s11 + $0x48] sm:$0xff]
            %v1530 = vld [vmem:[%s11 + $0x50] sm:$0xff]
            %v1531 = vld [vmem:[%s11 + $0x58] sm:$0xff]
            %v1532 = vld [vmem:[%s11 + $0x60] sm:$0xff]
            %v1533 = vld [vmem:[%s11 + $0x68] sm:$0xff]
            %v1534 = vld [vmem:[%s11 + $0x70] sm:$0xff]
            %v1535 = vld [vmem:[%s11 + $0x78] sm:$0xff]
            %v1536 = vld [vmem:[#allocation17] sm:$0x1]
            %v1538 = vlaneseq
            %v1539 = vshrl.u32 %v1538, 7
            %v1540 = vsub.s32 0, %v1539
            %v1541 = vrot.slane %v1536, %v1540
            %1543 = vmatprep.subr.mxu0 0.0
            %1544 = vmatpush1.msra.mxu0 %v1520
            %1545 = vmatprep.subr.mxu0 0.0
            %1546 = vmatpush1.msra.mxu0 %v1521
            %1547 = vmatprep.subr.mxu0 0.0
            %1548 = vmatpush1.msra.mxu0 %v1522
            %1549 = vmatprep.subr.mxu0 0.0
            %1550 = vmatpush1.msra.mxu0 %v1523
            %1551 = vmatprep.subr.mxu0 0.0
            %1552 = vmatpush1.msra.mxu0 %v1524
            %1553 = vmatprep.subr.mxu0 0.0
            %1554 = vmatpush1.msra.mxu0 %v1525
            %1555 = vmatprep.subr.mxu0 0.0
            %1556 = vmatpush1.msra.mxu0 %v1526
            %1557 = vmatprep.subr.mxu0 0.0
            %1558 = vmatpush1.msra.mxu0 %v1527
            %1559 = vmatprep.subr.mxu0 0.0
            %1560 = vmatpush1.msra.mxu0 %v1528
            %1561 = vmatprep.subr.mxu0 0.0
            %1562 = vmatpush1.msra.mxu0 %v1529
            %1563 = vmatprep.subr.mxu0 0.0
            %1564 = vmatpush1.msra.mxu0 %v1530
            %1565 = vmatprep.subr.mxu0 0.0
            %1566 = vmatpush1.msra.mxu0 %v1531
            %1567 = vmatprep.subr.mxu0 0.0
            %1568 = vmatpush1.msra.mxu0 %v1532
            %1569 = vmatprep.subr.mxu0 0.0
            %1570 = vmatpush1.msra.mxu0 %v1533
            %1571 = vmatprep.subr.mxu0 0.0
            %1572 = vmatpush1.msra.mxu0 %v1534
            %1573 = vmatprep.subr.mxu0 0.0
            %1574 = vmatpush1.msra.mxu0 %v1535
            %1575 = vmatprep.subr.mxu0 0.0
            %1576 = vmatpush1.msra.mxu0 0.0
            %1577 = vmatprep.subr.mxu0 0.0
            %1578 = vmatpush1.msra.mxu0 0.0
            %1579 = vmatprep.subr.mxu0 0.0
            %1580 = vmatpush1.msra.mxu0 0.0
            %1581 = vmatprep.subr.mxu0 0.0
            %1582 = vmatpush1.msra.mxu0 0.0
            %1583 = vmatprep.subr.mxu0 0.0
            %1584 = vmatpush1.msra.mxu0 0.0
            %1585 = vmatprep.subr.mxu0 0.0
            %1586 = vmatpush1.msra.mxu0 0.0
            %1587 = vmatprep.subr.mxu0 0.0
            %1588 = vmatpush1.msra.mxu0 0.0
            %1589 = vmatprep.subr.mxu0 0.0
            %1590 = vmatpush1.msra.mxu0 0.0
            %1591 = vmatprep.subr.mxu0 0.0
            %1592 = vmatpush1.msra.mxu0 0.0
            %1593 = vmatprep.subr.mxu0 0.0
            %1594 = vmatpush1.msra.mxu0 0.0
            %1595 = vmatprep.subr.mxu0 0.0
            %1596 = vmatpush1.msra.mxu0 0.0
            %1597 = vmatprep.subr.mxu0 0.0
            %1598 = vmatpush1.msra.mxu0 0.0
            %1599 = vmatprep.subr.mxu0 0.0
            %1600 = vmatpush1.msra.mxu0 0.0
            %1601 = vmatprep.subr.mxu0 0.0
            %1602 = vmatpush1.msra.mxu0 0.0
            %1603 = vmatprep.subr.mxu0 0.0
            %1604 = vmatpush1.msra.mxu0 0.0
            %1605 = vmatprep.subr.mxu0 0.0
            %1606 = vmatpush1.msra.mxu0 0.0
            %1607 = vmatprep.mubr.f32.mxu0 0.0
            %1608 = vmatmul.mubr.f32.gmra.mrb[0].mxu0 %v1519
            %v1609 = vpop.f32.mrb[0].mxu0
            %v1610 = vadd.f32 %v1541, %v1609
            %v1611 = vpop.f32.mrb[0].mxu0
            %1612 = vdwg.mxu0
            %1613 = vst [vmem:[%s13] sm:$0xff] %v1610
          $region128: #{dgcnn_forward.1} parent=111 // pred_fallthru
            _
        $region112: #{dgcnn_forward.1} parent=71 // pred_fallthru
          _
        // Predicated region
        $region129: #{dgcnn_forward.1} parent=71 // pred_check
          %p1614 = pneg %p357
        $region130: #{dgcnn_forward.1} parent=71 // pred_check_branch
          %1616 = sbr.rel (%p1614) target = $region132
        $region131: #{dgcnn_forward.1} parent=71 // pred_region
          _
        $region132: #{dgcnn_forward.1} parent=71 // pred_fallthru
          _
        // Predicated region
        $region133: #{dgcnn_forward.1} parent=71 // pred_check
          %p1617 = pneg %p357
        $region134: #{dgcnn_forward.1} parent=71 // pred_check_branch
          %1619 = sbr.rel (%p1617) target = $region136
        $region135: #{dgcnn_forward.1} parent=71 // pred_region
          _
        $region136: #{dgcnn_forward.1} parent=71 // pred_fallthru
          _
      $region72: #{dgcnn_forward.1} parent=5 // pred_fallthru
        _
      %p1620 = scmp.le.s32.totalorder 2, %s29
      // Predicated region
      $region137: #{dgcnn_forward.1} parent=5 // pred_check
        %p1621 = pneg %p1620
      $region138: #{dgcnn_forward.1} parent=5 // pred_check_branch
        %1623 = sbr.rel (%p1621) target = $region140
      $region139: #{dgcnn_forward.1} parent=5 // pred_region
        %s1624 = ssub.s32 %s29, 2
      $region140: #{dgcnn_forward.1} parent=5 // pred_fallthru
        _
    $region6: #{dgcnn_forward.1} parent=1 // loop_footer
      %s33 = sadd.s32 1, %s29
    $region7: #{dgcnn_forward.1} parent=1 // loop_footer_branch
      %28 = sbr.rel target = $region3
    $region8: #{dgcnn_forward.1} parent=1 // loop_exit
      _
    %1625 = vsyncpa [#allocation8], 1
    %s1626 = scalar_lea.sflag [#allocation8], 1
    %1627 = vsyncpa %s1626, 1
    %1628 = vsyncpa [#allocation10], 1
    %s1629 = scalar_lea.sflag [#allocation10], 1
    %1630 = vsyncpa %s1629, 1
    %1631 = vsyncpa [#allocation13], 1
    %s1632 = scalar_lea.sflag [#allocation13], 1
    %1633 = vsyncpa %s1632, 1
    %1634 = vsyncpa [#allocation16], 1

</llo_original>
